<compile_context>
chip_gen: v7x
topology: tpu7x:2x2x1
jax: 0.10.0
libtpu: 0.0.40
codegen_flags: <defaults>
</compile_context>

<pallas_src>
import functools

import jax
import jax.numpy as jnp
from jax import lax
from jax.experimental import pallas as pl
from jax.experimental.pallas import tpu as pltpu

_MiB = 1024 * 1024


def _roundup(x, m):
    return ((x + m - 1) // m) * m


def _cdiv(a, b):
    return -(-a // b)


def conv_relu_kernel(x_ref, w_ref, o_ref, *, row_chunk, chan_chunk):
    """One (TH, Wo, Cp) output tile of 3x3 conv (stride 1, pad 1, no bias) + ReLU.

    x_ref: (TH+2, Wp, Cinp)  zero-padded NHWC input tile (1-row halo top/bottom,
                              1 col left pad, >=1 col right pad; Wp % sublane == 0).
    w_ref: (9, Cinp, Cp)      3x3 taps flattened row-major (ky*3 + kx).
    o_ref: (TH, Wo, Cp)       output tile (Wo = roundup(W, sublane) <= Wp).
    """
    _, Wp, Cinp = x_ref.shape
    TH, Wo, Cp = o_ref.shape
    rows_c = row_chunk * Wp
    n_row_chunks = TH // row_chunk
    n_chan_chunks = Cp // chan_chunk

    def row_chunk_body(c, carry):
        r0 = pl.multiple_of(c * row_chunk, row_chunk)
        # One VMEM load of the chunk + its 2 halo rows.  Leading-dim slices of the loaded
        # value and the (row_chunk, Wp) -> rows_c merge are layout-preserving since
        # Wp is a multiple of the sublane granule.
        xc = x_ref[pl.ds(r0, row_chunk + 2)]                       # (row_chunk+2, Wp, Cinp)
        slabs = [xc[ky:ky + row_chunk].reshape(rows_c, Cinp) for ky in range(3)]

        for cc in range(n_chan_chunks):                            # static (usually 1)
            c0 = cc * chan_chunk
            acc = None                                             # vreg accumulation:
            for ky in range(3):                                    # no zero-init, no VMEM RMW
                xk = slabs[ky]
                for kx in range(3):
                    # kx column shift as a sublane rotation (XLU slot, not VALU); the
                    # wrapped garbage only lands in columns >= Wp - 2 >= W, which are
                    # never part of the valid output (cropped in the wrapper).
                    xs = xk if kx == 0 else pltpu.roll(xk, shift=rows_c - kx, axis=0)
                    w_tap = w_ref[ky * 3 + kx][:, c0:c0 + chan_chunk]   # (Cinp, chan_chunk)
                    part = jnp.dot(xs, w_tap, preferred_element_type=jnp.float32)
                    acc = part if acc is None else acc + part
            # Fused ReLU (f32), layout-preserving width slice (Wo % sublane == 0), store once.
            res = jnp.maximum(acc, 0.0).reshape(row_chunk, Wp, chan_chunk)
            val = res[:, :Wo, :].astype(o_ref.dtype)
            if n_chan_chunks == 1:
                o_ref[pl.ds(r0, row_chunk)] = val
            else:
                o_ref[pl.ds(r0, row_chunk), :, pl.ds(c0, chan_chunk)] = val
        return carry

    lax.fori_loop(0, n_row_chunks, row_chunk_body, 0)


def _tpu_vmem_capacity_bytes(default=64 * _MiB):
    try:
        cap = getattr(pltpu.get_tpu_info(), "vmem_capacity_bytes", None)
        if cap:
            return int(cap)
    except Exception:
        pass
    return default  # conservative (v7x-sized) fallback


def _default_compute_dtype(input_dtype):
    """bf16 operands (f32 accumulation) on v6e/v7x, input dtype elsewhere."""
    if jnp.dtype(input_dtype) != jnp.dtype(jnp.float32):
        return jnp.dtype(input_dtype)
    try:
        kind = jax.devices()[0].device_kind.lower()
    except Exception:
        kind = ""
    if any(t in kind for t in ("v6", "v7", "tpu7")):
        return jnp.dtype(jnp.bfloat16)
    return jnp.dtype(jnp.float32)


def _pick_tile_h(H, N, *, sub, Wp, Wo, Cinp, Cp, cd_bytes, out_bytes,
                 budget_bytes, max_tile=512):
    """Largest multiple-of-`sub` tile whose double-buffered footprint fits the budget,
    biased so N * nh >= 2 grid steps (keeps v7x's second TensorCore busy)."""
    Hs = _roundup(H, sub)
    w_b = 2 * 9 * Cinp * Cp * cd_bytes                      # resident weight block
    spill = 2 * sub * Wp * max(min(Cp, 128), 1) * 4         # per-chunk accumulator headroom

    def fits(th):
        in_b = 2 * (th + 2) * Wp * Cinp * cd_bytes          # double-buffered input tile
        out_b = 2 * th * Wo * Cp * out_bytes                # double-buffered output tile
        return in_b + out_b + w_b + spill <= budget_bytes

    cands = [th for th in range(sub, min(Hs, max_tile) + 1, sub) if fits(th)]
    if not cands:
        return sub
    th = max(cands)
    if N * _cdiv(H, th) < 2:                                # v7x megacore: >= 2 grid steps
        multi = [t for t in cands if _cdiv(H, t) >= 2]
        if multi:
            th = max(multi)
    return th


def conv_relu(x_nchw, weight_oihw, *, tile_h=None, compute_dtype=None,
              vmem_budget_bytes=None, vmem_limit_bytes=None,
              weight_pipeline_mode=None):
    """ConvRelu forward: x (N, Cin, H, W), weight (Cout, Cin, 3, 3) -> (N, Cout, H, W)."""
    N, Cin, H, W = x_nchw.shape
    Cout, Cin_w, kh, kw = weight_oihw.shape
    assert (Cin_w, kh, kw) == (Cin, 3, 3)
    out_dtype = x_nchw.dtype

    cdt = (_default_compute_dtype(out_dtype) if compute_dtype is None
           else jnp.dtype(compute_dtype))
    sub = 16 if cdt == jnp.dtype(jnp.bfloat16) else 8       # sublane granule
    Cinp = _roundup(Cin, sub)                               # contraction-dim padding
    Wp = _roundup(W + 2, sub)                               # padded width (>= W + 2)
    Wo = _roundup(W, sub)                                   # stored width (<= Wp)
    assert Wp >= W + 2, "roll-wrap garbage must land in cropped columns"
    next128 = _roundup(Cout, 128)
    Cp = next128 if next128 <= 2 * Cout else Cout           # conditional lane padding
    # NOTE(v6e/v7x): when folding taps, aim Cp at a multiple of 256 for Cout >= ~192.

    # Generation-aware VMEM budgets (128 MiB v5e/v6e vs 64 MiB v7x).
    vmem_cap = _tpu_vmem_capacity_bytes()
    big_part = vmem_cap >= 96 * _MiB
    if vmem_budget_bytes is None:
        vmem_budget_bytes = 48 * _MiB if big_part else 16 * _MiB
    if vmem_limit_bytes is None:
        vmem_limit_bytes = 100 * _MiB if big_part else 32 * _MiB

    cd_b = jnp.dtype(cdt).itemsize
    out_b = jnp.dtype(out_dtype).itemsize
    if tile_h is None:
        tile_h = _pick_tile_h(H, N, sub=sub, Wp=Wp, Wo=Wo, Cinp=Cinp, Cp=Cp,
                              cd_bytes=cd_b, out_bytes=out_b,
                              budget_bytes=vmem_budget_bytes)
    TH = min(_roundup(max(int(tile_h), 1), sub), _roundup(H, sub))
    Hp = _roundup(H, TH)                                    # pad H instead of asserting
    nh = Hp // TH

    # --- wrapper-side layout plumbing (plain JAX / XLA) ---------------------------------
    x_nhwc = jnp.transpose(x_nchw, (0, 2, 3, 1)).astype(cdt)            # (N, H, W, Cin)
    x_pad = jnp.pad(x_nhwc, ((0, 0), (1, 1 + Hp - H), (1, Wp - W - 1),
                             (0, Cinp - Cin)))                          # (N, Hp+2, Wp, Cinp)
    # Halo-expand H into nh non-overlapping (TH+2)-row tiles (2 duplicated rows per tile)
    # so the kernel input uses plain Blocked indexing with bounded VMEM per step.
    row_idx = jnp.arange(nh)[:, None] * TH + jnp.arange(TH + 2)[None, :]
    x_tiles = x_pad[:, row_idx]                                         # (N, nh, TH+2, Wp, Cinp)

    # (Cout, Cin, 3, 3) -> (3, 3, Cin, Cout) -> (9, Cin, Cout), pad K and N dims.
    w = jnp.transpose(weight_oihw, (2, 3, 1, 0)).reshape(9, Cin, Cout).astype(cdt)
    w = jnp.pad(w, ((0, 0), (0, Cinp - Cin), (0, Cp - Cout)))

    chan_chunk = 128 if Cp % 128 == 0 else Cp
    kernel = functools.partial(conv_relu_kernel, row_chunk=sub, chan_chunk=chan_chunk)

    # Constant index_map -> weight block stays resident (no re-DMA per step).  On v7x
    # pass weight_pipeline_mode=pl.Buffered(1) to drop its second buffer; that freed VMEM
    # can also be spent on pl.Buffered(3) for the input spec if the DMA is exposed.
    w_spec_kwargs = {}
    if weight_pipeline_mode is not None:
        w_spec_kwargs["pipeline_mode"] = weight_pipeline_mode
    w_spec = pl.BlockSpec((9, Cinp, Cp), lambda n, i: (0, 0, 0), **w_spec_kwargs)

    out = pl.pallas_call(
        kernel,
        out_shape=jax.ShapeDtypeStruct((N, nh, TH, Wo, Cp), out_dtype),
        grid_spec=pltpu.PrefetchScalarGridSpec(
            num_scalar_prefetch=0,
            grid=(N, nh),
            in_specs=[
                pl.BlockSpec((None, None, TH + 2, Wp, Cinp),
                             lambda n, i: (n, i, 0, 0, 0)),
                w_spec,
            ],
            out_specs=pl.BlockSpec((None, None, TH, Wo, Cp),
                                   lambda n, i: (n, i, 0, 0, 0)),
        ),
        compiler_params=pltpu.CompilerParams(
            dimension_semantics=("parallel", "parallel"),
            vmem_limit_bytes=vmem_limit_bytes,
        ),
    )(x_tiles, w)

    # Crop H / W / channel padding (no-op slices when everything is already aligned).
    out = out.reshape(N, Hp, Wo, Cp)[:, :H, :W, :Cout]
    return jnp.transpose(out, (0, 3, 1, 2))


if __name__ == "__main__":
    key = jax.random.PRNGKey(0)
    k_x, k_w = jax.random.split(key)

    N, Cin, Cout, H, W = 2, 4, 8, 16, 16
    x = jax.random.normal(k_x, (N, Cin, H, W), dtype=jnp.float32)
    weight = jax.random.normal(k_w, (Cout, Cin, 3, 3), dtype=jnp.float32) * 0.1

    def ref_conv_relu(xx, ww):
        r = jax.lax.conv_general_dilated(
            xx, ww, window_strides=(1, 1), padding=((1, 1), (1, 1)),
            dimension_numbers=("NCHW", "OIHW", "NCHW"))
        return jnp.maximum(r, 0.0)

    ref = ref_conv_relu(x, weight)

    # f32 path, explicit spatial tiling: grid = (N=2, H/8=2) -> 4 parallel steps.
    out = jax.block_until_ready(conv_relu(x, weight, tile_h=8, compute_dtype=jnp.float32))
    assert out.shape == (N, Cout, H, W)
    assert jnp.allclose(out, ref, atol=1e-4, rtol=1e-4)

    # Auto path: bf16 operands (f32 accumulation) on v6e/v7x, f32 elsewhere; auto tile.
    # 3e-2 tolerance is the expected bf16-operand error, not a bug.
    out_auto = jax.block_until_ready(conv_relu(x, weight))
    assert out_auto.shape == (N, Cout, H, W)
    assert jnp.allclose(out_auto, ref, atol=3e-2, rtol=3e-2)

    # H not divisible by the tile: exercises the H-padding path and the >=2-step bias.
    H2 = 13
    x2 = jax.random.normal(k_x, (1, Cin, H2, W), dtype=jnp.float32)
    ref2 = ref_conv_relu(x2, weight)
    out2 = jax.block_until_ready(conv_relu(x2, weight, compute_dtype=jnp.float32))
    assert out2.shape == (1, Cout, H2, W)
    assert jnp.allclose(out2, ref2, atol=1e-4, rtol=1e-4)

    print("KERNEL_OK")
</pallas_src>

<mosaic_0001>
module attributes {stable_mosaic.version = 11 : i64} {
  func.func @conv_relu_kernel(%arg0: i32, %arg1: i32, %arg2: memref<1x1x10x24x8xf32, #tpu.memory_space<vmem>>, %arg3: memref<9x8x8xf32, #tpu.memory_space<vmem>>, %arg4: memref<1x1x8x16x8xf32, #tpu.memory_space<vmem>>) attributes {dimension_semantics = [#tpu.dimension_semantics<parallel>, #tpu.dimension_semantics<parallel>], iteration_bounds = array<i64: 2, 2>, scalar_prefetch = 0 : i64, scratch_operands = 0 : i64, tpu.core_type = #tpu.core_type<tc>, window_params = [{transform_indices = @transform_0, window_bounds = array<i64: 1, 1, 10, 24, 8>}, {pipeline_mode = #tpu.pipeline_mode<synchronous>, transform_indices = @transform_1, window_bounds = array<i64: 9, 8, 8>}, {transform_indices = @transform_2, window_bounds = array<i64: 1, 1, 8, 16, 8>}]} {
    %c0_i32 = arith.constant 0 : i32
    %c8_i32 = arith.constant 8 : i32
    %0 = arith.muli %c0_i32, %c8_i32 : i32
    %1 = tpu.assume_multiple %0, 8 : i32
    %c0 = arith.constant 0 : index
    %c0_0 = arith.constant 0 : index
    %2 = arith.index_cast %1 : i32 to index
    %c0_1 = arith.constant 0 : index
    %c0_2 = arith.constant 0 : index
    %3 = vector.load %arg2[%c0, %c0_0, %2, %c0_1, %c0_2] : memref<1x1x10x24x8xf32, #tpu.memory_space<vmem>>, vector<1x1x10x24x8xf32>
    %4 = vector.shape_cast %3 : vector<1x1x10x24x8xf32> to vector<10x24x8xf32>
    %5 = vector.extract_strided_slice %4 {offsets = [0, 0, 0], sizes = [8, 24, 8], strides = [1, 1, 1]} : vector<10x24x8xf32> to vector<8x24x8xf32>
    %6 = vector.shape_cast %5 : vector<8x24x8xf32> to vector<192x8xf32>
    %7 = vector.extract_strided_slice %4 {offsets = [1, 0, 0], sizes = [8, 24, 8], strides = [1, 1, 1]} : vector<10x24x8xf32> to vector<8x24x8xf32>
    %8 = vector.shape_cast %7 : vector<8x24x8xf32> to vector<192x8xf32>
    %9 = vector.extract_strided_slice %4 {offsets = [2, 0, 0], sizes = [8, 24, 8], strides = [1, 1, 1]} : vector<10x24x8xf32> to vector<8x24x8xf32>
    %10 = vector.shape_cast %9 : vector<8x24x8xf32> to vector<192x8xf32>
    %c0_3 = arith.constant 0 : index
    %c0_4 = arith.constant 0 : index
    %c0_5 = arith.constant 0 : index
    %11 = vector.load %arg3[%c0_3, %c0_4, %c0_5] : memref<9x8x8xf32, #tpu.memory_space<vmem>>, vector<1x8x8xf32>
    %12 = vector.shape_cast %11 : vector<1x8x8xf32> to vector<8x8xf32>
    %cst = arith.constant dense<0.000000e+00> : vector<192x8xf32>
    %13 = tpu.matmul %6, %12, %cst {dimension_numbers = #tpu.dot_dimension_numbers<[1], [0], [0], [1], [0, 0, 1, 1], [], []>} : vector<192x8xf32>, vector<8x8xf32>, vector<192x8xf32> -> vector<192x8xf32>
    %c191_i32 = arith.constant 191 : i32
    %14 = tpu.dynamic_rotate %6 by %c191_i32 dim 0 : vector<192x8xf32>, i32 -> vector<192x8xf32>
    %c1 = arith.constant 1 : index
    %c0_6 = arith.constant 0 : index
    %c0_7 = arith.constant 0 : index
    %15 = vector.load %arg3[%c1, %c0_6, %c0_7] : memref<9x8x8xf32, #tpu.memory_space<vmem>>, vector<1x8x8xf32>
    %16 = vector.shape_cast %15 : vector<1x8x8xf32> to vector<8x8xf32>
    %cst_8 = arith.constant dense<0.000000e+00> : vector<192x8xf32>
    %17 = tpu.matmul %14, %16, %cst_8 {dimension_numbers = #tpu.dot_dimension_numbers<[1], [0], [0], [1], [0, 0, 1, 1], [], []>} : vector<192x8xf32>, vector<8x8xf32>, vector<192x8xf32> -> vector<192x8xf32>
    %18 = arith.addf %13, %17 : vector<192x8xf32>
    %c190_i32 = arith.constant 190 : i32
    %19 = tpu.dynamic_rotate %6 by %c190_i32 dim 0 : vector<192x8xf32>, i32 -> vector<192x8xf32>
    %c2 = arith.constant 2 : index
    %c0_9 = arith.constant 0 : index
    %c0_10 = arith.constant 0 : index
    %20 = vector.load %arg3[%c2, %c0_9, %c0_10] : memref<9x8x8xf32, #tpu.memory_space<vmem>>, vector<1x8x8xf32>
    %21 = vector.shape_cast %20 : vector<1x8x8xf32> to vector<8x8xf32>
    %cst_11 = arith.constant dense<0.000000e+00> : vector<192x8xf32>
    %22 = tpu.matmul %19, %21, %cst_11 {dimension_numbers = #tpu.dot_dimension_numbers<[1], [0], [0], [1], [0, 0, 1, 1], [], []>} : vector<192x8xf32>, vector<8x8xf32>, vector<192x8xf32> -> vector<192x8xf32>
    %23 = arith.addf %18, %22 : vector<192x8xf32>
    %c3 = arith.constant 3 : index
    %c0_12 = arith.constant 0 : index
    %c0_13 = arith.constant 0 : index
    %24 = vector.load %arg3[%c3, %c0_12, %c0_13] : memref<9x8x8xf32, #tpu.memory_space<vmem>>, vector<1x8x8xf32>
    %25 = vector.shape_cast %24 : vector<1x8x8xf32> to vector<8x8xf32>
    %cst_14 = arith.constant dense<0.000000e+00> : vector<192x8xf32>
    %26 = tpu.matmul %8, %25, %cst_14 {dimension_numbers = #tpu.dot_dimension_numbers<[1], [0], [0], [1], [0, 0, 1, 1], [], []>} : vector<192x8xf32>, vector<8x8xf32>, vector<192x8xf32> -> vector<192x8xf32>
    %27 = arith.addf %23, %26 : vector<192x8xf32>
    %c191_i32_15 = arith.constant 191 : i32
    %28 = tpu.dynamic_rotate %8 by %c191_i32_15 dim 0 : vector<192x8xf32>, i32 -> vector<192x8xf32>
    %c4 = arith.constant 4 : index
    %c0_16 = arith.constant 0 : index
    %c0_17 = arith.constant 0 : index
    %29 = vector.load %arg3[%c4, %c0_16, %c0_17] : memref<9x8x8xf32, #tpu.memory_space<vmem>>, vector<1x8x8xf32>
    %30 = vector.shape_cast %29 : vector<1x8x8xf32> to vector<8x8xf32>
    %cst_18 = arith.constant dense<0.000000e+00> : vector<192x8xf32>
    %31 = tpu.matmul %28, %30, %cst_18 {dimension_numbers = #tpu.dot_dimension_numbers<[1], [0], [0], [1], [0, 0, 1, 1], [], []>} : vector<192x8xf32>, vector<8x8xf32>, vector<192x8xf32> -> vector<192x8xf32>
    %32 = arith.addf %27, %31 : vector<192x8xf32>
    %c190_i32_19 = arith.constant 190 : i32
    %33 = tpu.dynamic_rotate %8 by %c190_i32_19 dim 0 : vector<192x8xf32>, i32 -> vector<192x8xf32>
    %c5 = arith.constant 5 : index
    %c0_20 = arith.constant 0 : index
    %c0_21 = arith.constant 0 : index
    %34 = vector.load %arg3[%c5, %c0_20, %c0_21] : memref<9x8x8xf32, #tpu.memory_space<vmem>>, vector<1x8x8xf32>
    %35 = vector.shape_cast %34 : vector<1x8x8xf32> to vector<8x8xf32>
    %cst_22 = arith.constant dense<0.000000e+00> : vector<192x8xf32>
    %36 = tpu.matmul %33, %35, %cst_22 {dimension_numbers = #tpu.dot_dimension_numbers<[1], [0], [0], [1], [0, 0, 1, 1], [], []>} : vector<192x8xf32>, vector<8x8xf32>, vector<192x8xf32> -> vector<192x8xf32>
    %37 = arith.addf %32, %36 : vector<192x8xf32>
    %c6 = arith.constant 6 : index
    %c0_23 = arith.constant 0 : index
    %c0_24 = arith.constant 0 : index
    %38 = vector.load %arg3[%c6, %c0_23, %c0_24] : memref<9x8x8xf32, #tpu.memory_space<vmem>>, vector<1x8x8xf32>
    %39 = vector.shape_cast %38 : vector<1x8x8xf32> to vector<8x8xf32>
    %cst_25 = arith.constant dense<0.000000e+00> : vector<192x8xf32>
    %40 = tpu.matmul %10, %39, %cst_25 {dimension_numbers = #tpu.dot_dimension_numbers<[1], [0], [0], [1], [0, 0, 1, 1], [], []>} : vector<192x8xf32>, vector<8x8xf32>, vector<192x8xf32> -> vector<192x8xf32>
    %41 = arith.addf %37, %40 : vector<192x8xf32>
    %c191_i32_26 = arith.constant 191 : i32
    %42 = tpu.dynamic_rotate %10 by %c191_i32_26 dim 0 : vector<192x8xf32>, i32 -> vector<192x8xf32>
    %c7 = arith.constant 7 : index
    %c0_27 = arith.constant 0 : index
    %c0_28 = arith.constant 0 : index
    %43 = vector.load %arg3[%c7, %c0_27, %c0_28] : memref<9x8x8xf32, #tpu.memory_space<vmem>>, vector<1x8x8xf32>
    %44 = vector.shape_cast %43 : vector<1x8x8xf32> to vector<8x8xf32>
    %cst_29 = arith.constant dense<0.000000e+00> : vector<192x8xf32>
    %45 = tpu.matmul %42, %44, %cst_29 {dimension_numbers = #tpu.dot_dimension_numbers<[1], [0], [0], [1], [0, 0, 1, 1], [], []>} : vector<192x8xf32>, vector<8x8xf32>, vector<192x8xf32> -> vector<192x8xf32>
    %46 = arith.addf %41, %45 : vector<192x8xf32>
    %c190_i32_30 = arith.constant 190 : i32
    %47 = tpu.dynamic_rotate %10 by %c190_i32_30 dim 0 : vector<192x8xf32>, i32 -> vector<192x8xf32>
    %c8 = arith.constant 8 : index
    %c0_31 = arith.constant 0 : index
    %c0_32 = arith.constant 0 : index
    %48 = vector.load %arg3[%c8, %c0_31, %c0_32] : memref<9x8x8xf32, #tpu.memory_space<vmem>>, vector<1x8x8xf32>
    %49 = vector.shape_cast %48 : vector<1x8x8xf32> to vector<8x8xf32>
    %cst_33 = arith.constant dense<0.000000e+00> : vector<192x8xf32>
    %50 = tpu.matmul %47, %49, %cst_33 {dimension_numbers = #tpu.dot_dimension_numbers<[1], [0], [0], [1], [0, 0, 1, 1], [], []>} : vector<192x8xf32>, vector<8x8xf32>, vector<192x8xf32> -> vector<192x8xf32>
    %51 = arith.addf %46, %50 : vector<192x8xf32>
    %cst_34 = arith.constant 0.000000e+00 : f32
    %52 = vector.broadcast %cst_34 : f32 to vector<192x8xf32>
    %53 = arith.maximumf %51, %52 : vector<192x8xf32>
    %54 = vector.shape_cast %53 : vector<192x8xf32> to vector<8x24x8xf32>
    %55 = vector.extract_strided_slice %54 {offsets = [0, 0, 0], sizes = [8, 16, 8], strides = [1, 1, 1]} : vector<8x24x8xf32> to vector<8x16x8xf32>
    %c0_35 = arith.constant 0 : index
    %c0_36 = arith.constant 0 : index
    %56 = arith.index_cast %1 : i32 to index
    %c0_37 = arith.constant 0 : index
    %c0_38 = arith.constant 0 : index
    %57 = vector.load %arg4[%c0_35, %c0_36, %56, %c0_37, %c0_38] : memref<1x1x8x16x8xf32, #tpu.memory_space<vmem>>, vector<1x1x8x16x8xf32>
    %58 = vector.shape_cast %57 : vector<1x1x8x16x8xf32> to vector<8x16x8xf32>
    %59 = vector.shape_cast %55 : vector<8x16x8xf32> to vector<1x1x8x16x8xf32>
    tpu.vector_store %arg4[%c0_35, %c0_36, %56, %c0_37, %c0_38], %59 {strides = array<i32>} : memref<1x1x8x16x8xf32, #tpu.memory_space<vmem>>, vector<1x1x8x16x8xf32>,
    %c1_i32 = arith.constant 1 : i32
    return
  }
  func.func @transform_0(%arg0: i32, %arg1: i32) -> (i32, i32, i32, i32, i32) {
    %c0_i32 = arith.constant 0 : i32
    %c0_i32_0 = arith.constant 0 : i32
    %c0_i32_1 = arith.constant 0 : i32
    %c0_i32_2 = arith.constant 0 : i32
    return %arg0, %arg1, %c0_i32, %c0_i32_0, %c0_i32_1 : i32, i32, i32, i32, i32
  }
  func.func @transform_1(%arg0: i32, %arg1: i32) -> (i32, i32, i32) {
    %c0_i32 = arith.constant 0 : i32
    %c0_i32_0 = arith.constant 0 : i32
    %c0_i32_1 = arith.constant 0 : i32
    %c0_i32_2 = arith.constant 0 : i32
    return %c0_i32, %c0_i32_0, %c0_i32_1 : i32, i32, i32
  }
  func.func @transform_2(%arg0: i32, %arg1: i32) -> (i32, i32, i32, i32, i32) {
    %c0_i32 = arith.constant 0 : i32
    %c0_i32_0 = arith.constant 0 : i32
    %c0_i32_1 = arith.constant 0 : i32
    %c0_i32_2 = arith.constant 0 : i32
    return %arg0, %arg1, %c0_i32, %c0_i32_0, %c0_i32_1 : i32, i32, i32, i32, i32
  }
}

</mosaic_0001>

<llo_original>
// kernel: tpu_custom_call.1
$region0: #{tpu_custom_call.1}
  #allocation0 [shape = 'u32[]', space=smem, size = 0x4, offset = 0x4, fixed_abs, tag = 'smem constant byte address 0x4 - core index']
  #allocation1 [shape = 'u32[144,128]{1,0:T(1,128)}', space=vmem, size = 0x12000, scoped, tag = 'internal scratch']
  %s0 = inlined_call_operand.vmem [shape: f32[2,2,10,24,8], index: 0, kind: input, shape index: {}]
  %s1 = inlined_call_operand.vmem [shape: f32[9,8,8], index: 1, kind: input, shape index: {}]
  %s2 = inlined_call_operand.vmem [shape: f32[2,2,8,16,8], index: 2, kind: output, shape index: {}]
  %s3 = sld [smem:[#allocation0]]
  $region41: #{tpu_custom_call.1} parent=0
    _
  %s5 = ssub.s32 1, %s3
  %s6 = scalar_select 0, %s5, %s3
  loop: start=0, step=1, limit=6
  $region2: #{tpu_custom_call.1} parent=0 // loop_pre_header
    _
  $region3: #{tpu_custom_call.1} parent=0 // loop_header
    %s8 = sphi 0, %s12
    %p9 = scmp.ge.s32.totalorder %s8, 6
    %s15 = sphi 0, %s27
    %s16 = sphi 0, %s23
    %s17 = sphi 0, %s15
    %s18 = sphi 0, %s16
    %s19 = sphi 0, %s17
    %s20 = sphi 0, %s18
    %s32 = sphi 0, %s34
    %s35 = sphi 0, %s32
    %s36 = sphi 0, %s35
    %s52 = sphi 0, %s36
    %s56 = sphi 0, %s56
    %s58 = sphi 0, %s56
    %s59 = sphi 0, %s58
    %s73 = sphi 0, %s59
    %s81 = sphi 0, %s83
    %s84 = sphi 0, %s81
    %s85 = sphi 0, %s84
    %s101 = sphi 0, %s85
  $region4: #{tpu_custom_call.1} parent=0 // loop_header_branch
    %11 = sbr.rel (%p9) target = $region8
  $region5: #{tpu_custom_call.1} parent=0 // loop_body
    %s13 = ssub.s32 %s8, 1
    %s14 = ssub.s32 %s8, 2
    %s21 = sadd.s32 1, %s16
    %p22 = scmp.ge.s32.totalorder %s21, 2
    %s23 = scalar_select %p22, 0, %s21
    %s24 = sadd.s32 1, %s15
    %s25 = scalar_select %p22, %s24, %s15
    %p26 = scmp.ge.s32.totalorder %s25, 2
    %s27 = scalar_select %p26, 0, %s25
    %s28 = ssub.s32 %s15, %s27
    %s29 = ssub.s32 %s16, %s23
    %s30 = sor.u32 %s28, %s29
    %p31 = scmp.eq.s32.totalorder %s30, 0
    %s33 = sadd.s32 %s32, 1
    %s34 = scalar_select %p31, %s32, %s33
    %p37 = pneg %p31
    %p38 = scmp.eq.s32.totalorder %s8, 3
    %p39 = por %p37, %p38
    %p40 = scmp.ne.s32.totalorder %s32, %s35
    %p41 = scmp.eq.s32.totalorder %s8, 0
    %p42 = por %p40, %p41
    %p43 = scmp.ne.s32.totalorder %s32, %s35
    %p44 = scmp.eq.s32.totalorder %s13, 3
    %p45 = por %p43, %p44
    %p46 = scmp.ne.s32.totalorder %s35, %s36
    %p47 = scmp.eq.s32.totalorder %s13, 0
    %p48 = por %p46, %p47
    %p49 = scmp.ne.s32.totalorder %s35, %s36
    %p50 = scmp.eq.s32.totalorder %s14, 3
    %p51 = por %p49, %p50
    %p53 = scmp.ne.s32.totalorder %s36, %s52
    %p54 = scmp.eq.s32.totalorder %s14, 0
    %p55 = por %p53, %p54
    %s57 = sadd.s32 %s56, 1
    %p60 = scmp.eq.s32.totalorder %s8, 3
    %p61 = scmp.ne.s32.totalorder %s56, %s58
    %p62 = scmp.eq.s32.totalorder %s8, 0
    %p63 = por %p61, %p62
    %p64 = scmp.ne.s32.totalorder %s56, %s58
    %p65 = scmp.eq.s32.totalorder %s13, 3
    %p66 = por %p64, %p65
    %p67 = scmp.ne.s32.totalorder %s58, %s59
    %p68 = scmp.eq.s32.totalorder %s13, 0
    %p69 = por %p67, %p68
    %p70 = scmp.ne.s32.totalorder %s58, %s59
    %p71 = scmp.eq.s32.totalorder %s14, 3
    %p72 = por %p70, %p71
    %p74 = scmp.ne.s32.totalorder %s59, %s73
    %p75 = scmp.eq.s32.totalorder %s14, 0
    %p76 = por %p74, %p75
    %s77 = ssub.s32 %s15, %s27
    %s78 = ssub.s32 %s16, %s23
    %s79 = sor.u32 %s77, %s78
    %p80 = scmp.eq.s32.totalorder %s79, 0
    %s82 = sadd.s32 %s81, 1
    %s83 = scalar_select %p80, %s81, %s82
    %p86 = pneg %p80
    %p87 = scmp.eq.s32.totalorder %s8, 3
    %p88 = por %p86, %p87
    %p89 = scmp.ne.s32.totalorder %s81, %s84
    %p90 = scmp.eq.s32.totalorder %s8, 0
    %p91 = por %p89, %p90
    %p92 = scmp.ne.s32.totalorder %s81, %s84
    %p93 = scmp.eq.s32.totalorder %s13, 3
    %p94 = por %p92, %p93
    %p95 = scmp.ne.s32.totalorder %s84, %s85
    %p96 = scmp.eq.s32.totalorder %s13, 0
    %p97 = por %p95, %p96
    %p98 = scmp.ne.s32.totalorder %s84, %s85
    %p99 = scmp.eq.s32.totalorder %s14, 3
    %p100 = por %p98, %p99
    %p102 = scmp.ne.s32.totalorder %s85, %s101
    %p103 = scmp.eq.s32.totalorder %s14, 0
    %p104 = por %p102, %p103
    %p105 = scmp.le.s32.totalorder 1, %s8
    %p106 = scmp.lt.s32.totalorder %s8, 5
    %p107 = pnand %p105, %p106
    %p108 = pneg %p107
    // Predicated region
    $region9: #{tpu_custom_call.1} parent=5 // pred_check
      _
    $region10: #{tpu_custom_call.1} parent=5 // pred_check_branch
      %110 = sbr.rel (%p107) target = $region12
    $region11: #{tpu_custom_call.1} parent=5 // pred_region
      %s111 = ssub.s32 %s8, 1
      // Predicated region
      $region13: #{tpu_custom_call.1} parent=11 // pred_check
        %p112 = pneg %p69
      $region14: #{tpu_custom_call.1} parent=11 // pred_check_branch
        %114 = sbr.rel (%p112) target = $region16
      $region15: #{tpu_custom_call.1} parent=11 // pred_region
        _
      $region16: #{tpu_custom_call.1} parent=11 // pred_fallthru
        _
    $region12: #{tpu_custom_call.1} parent=5 // pred_fallthru
      _
    %p115 = scmp.lt.s32.totalorder %s8, 4
    // Predicated region
    $region17: #{tpu_custom_call.1} parent=5 // pred_check
      %p116 = pneg %p115
    $region18: #{tpu_custom_call.1} parent=5 // pred_check_branch
      %118 = sbr.rel (%p116) target = $region20
    $region19: #{tpu_custom_call.1} parent=5 // pred_region
      // Predicated region
      $region21: #{tpu_custom_call.1} parent=19 // pred_check
        %p119 = pneg %p42
      $region22: #{tpu_custom_call.1} parent=19 // pred_check_branch
        %121 = sbr.rel (%p119) target = $region24
      $region23: #{tpu_custom_call.1} parent=19 // pred_region
        %p122 = scmp.lt.s32.totalorder %s15, 1
        %s123 = scalar_select %p122, %s15, 1
        %p124 = scmp.lt.s32.totalorder %s16, 1
        %s125 = scalar_select %p124, %s16, 1
        %s126 = smul.addr %s125, 30
        %s127 = smul.addr %s123, 60
        %s128 = sadd.s32 %s126, %s127
        %s129 = smul.addr %s128, 8
        %s130 = scalar_lea.vmem %s0, %s129
      $region24: #{tpu_custom_call.1} parent=19 // pred_fallthru
        _
    $region20: #{tpu_custom_call.1} parent=5 // pred_fallthru
      _
    %p131 = scmp.le.s32.totalorder 1, %s8
    %p132 = scmp.lt.s32.totalorder %s8, 5
    %p133 = pnand %p131, %p132
    %p134 = pneg %p133
    // Predicated region
    $region25: #{tpu_custom_call.1} parent=5 // pred_check
      _
    $region26: #{tpu_custom_call.1} parent=5 // pred_check_branch
      %136 = sbr.rel (%p133) target = $region28
    $region27: #{tpu_custom_call.1} parent=5 // pred_region
      %s137 = ssub.s32 %s8, 1
      %p138 = scmp.lt.s32.totalorder %s17, 1
      %s139 = scalar_select %p138, %s17, 1
      %p140 = scmp.lt.s32.totalorder %s18, 1
      %s141 = scalar_select %p140, %s18, 1
      %s142 = smul.addr %s141, 30
      %s143 = smul.addr %s139, 60
      %s144 = sadd.s32 %s142, %s143
      %s145 = smul.addr %s144, 8
      %s146 = scalar_lea.vmem %s0, %s145
      %p147 = pneg %p48
      %p148 = pneg %p45
      %p149 = pneg %p69
      %p150 = pneg %p66
      %p151 = pneg %p97
      %p152 = pneg %p94
      %p153 = scmp.lt.s32.totalorder %s17, 1
      %s154 = scalar_select %p153, %s17, 1
      %p155 = scmp.lt.s32.totalorder %s18, 1
      %s156 = scalar_select %p155, %s18, 1
      %s157 = smul.addr %s156, 16
      %s158 = smul.addr %s154, 32
      %s159 = sadd.s32 %s157, %s158
      %s160 = smul.addr %s159, 8
      %s161 = scalar_lea.vmem %s2, %s160
      %p162 = scmp.lt.s32.totalorder %s17, 1
      %s163 = scalar_select %p162, %s17, 1
      %p164 = scmp.lt.s32.totalorder %s18, 1
      %s165 = scalar_select %p164, %s18, 1
      %s166 = smul.addr %s165, 30
      %s167 = smul.addr %s163, 60
      %s168 = sadd.s32 %s166, %s167
      %s169 = smul.addr %s168, 8
      %s170 = scalar_lea.vmem %s0, %s169
      %p171 = scmp.lt.s32.totalorder %s17, 1
      %s172 = scalar_select %p171, %s17, 1
      %p173 = scmp.lt.s32.totalorder %s18, 1
      %s174 = scalar_select %p173, %s18, 1
      %s175 = smul.addr %s174, 16
      %s176 = smul.addr %s172, 32
      %s177 = sadd.s32 %s175, %s176
      %s178 = smul.addr %s177, 8
      %s179 = scalar_lea.vmem %s2, %s178
      %s180 = smul.u32 0, 24
      %s181 = scalar_lea.vmem %s170, %s180
      %v182 = vld [vmem:[%s181] sm:$0xff]
      %v183 = vld [vmem:[%s181 + $0x8] sm:$0xff]
      %v184 = vld [vmem:[%s181 + $0x10] sm:$0xff]
      %v185 = vld [vmem:[%s181 + $0x18] sm:$0xff]
      %v186 = vld [vmem:[%s181 + $0x20] sm:$0xff]
      %v187 = vld [vmem:[%s181 + $0x28] sm:$0xff]
      %v188 = vld [vmem:[%s181 + $0x30] sm:$0xff]
      %v189 = vld [vmem:[%s181 + $0x38] sm:$0xff]
      %v190 = vld [vmem:[%s181 + $0x40] sm:$0xff]
      %v191 = vld [vmem:[%s181 + $0x48] sm:$0xff]
      %v192 = vld [vmem:[%s181 + $0x50] sm:$0xff]
      %v193 = vld [vmem:[%s181 + $0x58] sm:$0xff]
      %v194 = vld [vmem:[%s181 + $0x60] sm:$0xff]
      %v195 = vld [vmem:[%s181 + $0x68] sm:$0xff]
      %v196 = vld [vmem:[%s181 + $0x70] sm:$0xff]
      %v197 = vld [vmem:[%s181 + $0x78] sm:$0xff]
      %v198 = vld [vmem:[%s181 + $0x80] sm:$0xff]
      %v199 = vld [vmem:[%s181 + $0x88] sm:$0xff]
      %v200 = vld [vmem:[%s181 + $0x90] sm:$0xff]
      %v201 = vld [vmem:[%s181 + $0x98] sm:$0xff]
      %v202 = vld [vmem:[%s181 + $0xa0] sm:$0xff]
      %v203 = vld [vmem:[%s181 + $0xa8] sm:$0xff]
      %v204 = vld [vmem:[%s181 + $0xb0] sm:$0xff]
      %v205 = vld [vmem:[%s181 + $0xb8] sm:$0xff]
      %v206 = vld [vmem:[%s181 + $0xc0] sm:$0xff]
      %v207 = vld [vmem:[%s181 + $0xc8] sm:$0xff]
      %v208 = vld [vmem:[%s181 + $0xd0] sm:$0xff]
      %v209 = vld [vmem:[%s181 + $0xd8] sm:$0xff]
      %v210 = vld [vmem:[%s181 + $0xe0] sm:$0xff]
      %v211 = vld [vmem:[%s181 + $0xe8] sm:$0xff]
      %v212 = vld [vmem:[%s1] sm:$0xff]
      %v213 = vrot.slane %v182, 1
      %v214 = vrot.slane %v183, 1
      %v215 = vrot.slane %v184, 1
      %v216 = vrot.slane %v185, 1
      %v217 = vrot.slane %v186, 1
      %v218 = vrot.slane %v187, 1
      %v219 = vrot.slane %v188, 1
      %v220 = vrot.slane %v189, 1
      %v221 = vrot.slane %v190, 1
      %v222 = vrot.slane %v191, 1
      %v223 = vrot.slane %v192, 1
      %v224 = vrot.slane %v193, 1
      %v225 = vrot.slane %v194, 1
      %v226 = vrot.slane %v195, 1
      %v227 = vrot.slane %v196, 1
      %v228 = vrot.slane %v197, 1
      %v229 = vrot.slane %v198, 1
      %v230 = vrot.slane %v199, 1
      %v231 = vrot.slane %v200, 1
      %v232 = vrot.slane %v201, 1
      %v233 = vrot.slane %v202, 1
      %v234 = vrot.slane %v203, 1
      %v235 = vrot.slane %v204, 1
      %v236 = vrot.slane %v205, 1
      %v237 = vlaneseq
      %v238 = vshrl.u32 %v237, 7
      %vm239 = vcmp.lt.s32.totalorder %v238, 7
      %v240 = vsel %vm239, %v235, %v236
      %v241 = vsel %vm239, %v234, %v235
      %v242 = vsel %vm239, %v233, %v234
      %v243 = vsel %vm239, %v232, %v233
      %v244 = vsel %vm239, %v231, %v232
      %v245 = vsel %vm239, %v230, %v231
      %v246 = vsel %vm239, %v229, %v230
      %v247 = vsel %vm239, %v228, %v229
      %v248 = vsel %vm239, %v227, %v228
      %v249 = vsel %vm239, %v226, %v227
      %v250 = vsel %vm239, %v225, %v226
      %v251 = vsel %vm239, %v224, %v225
      %v252 = vsel %vm239, %v223, %v224
      %v253 = vsel %vm239, %v222, %v223
      %v254 = vsel %vm239, %v221, %v222
      %v255 = vsel %vm239, %v220, %v221
      %v256 = vsel %vm239, %v219, %v220
      %v257 = vsel %vm239, %v218, %v219
      %v258 = vsel %vm239, %v217, %v218
      %v259 = vsel %vm239, %v216, %v217
      %v260 = vsel %vm239, %v215, %v216
      %v261 = vsel %vm239, %v214, %v215
      %v262 = vsel %vm239, %v213, %v214
      %v263 = vsel %vm239, %v236, %v213
      %s264 = scalar_lea.vmem %s1, 8
      %v265 = vld [vmem:[%s264] sm:$0xff]
      %vm266 = vcmask 64512
      %v268 = vsel %vm266, %v262, 0
      %v271 = vsel %vm266, %v261, 0
      %v274 = vsel %vm266, %v260, 0
      %v277 = vsel %vm266, %v259, 0
      %v280 = vsel %vm266, %v258, 0
      %v283 = vsel %vm266, %v257, 0
      %v286 = vsel %vm266, %v256, 0
      %v289 = vsel %vm266, %v255, 0
      %v292 = vsel %vm266, %v254, 0
      %v295 = vsel %vm266, %v253, 0
      %v298 = vsel %vm266, %v252, 0
      %v301 = vsel %vm266, %v251, 0
      %v304 = vsel %vm266, %v250, 0
      %v307 = vsel %vm266, %v249, 0
      %v310 = vsel %vm266, %v248, 0
      %v313 = vsel %vm266, %v247, 0
      %v316 = vsel %vm266, %v246, 0
      %v319 = vsel %vm266, %v245, 0
      %v322 = vsel %vm266, %v244, 0
      %v325 = vsel %vm266, %v243, 0
      %v328 = vsel %vm266, %v242, 0
      %v331 = vsel %vm266, %v241, 0
      %v334 = vsel %vm266, %v240, 0
      %v337 = vsel %vm266, %v263, 0
      %339 = vmatprep.subr.mxu0 0.0
      %340 = vmatpush1.msra.mxu0 %v265
      %341 = vmatprep.subr.mxu0 0.0
      %342 = vmatpush1.msra.mxu0 0.0
      %343 = vmatprep.subr.mxu0 0.0
      %344 = vmatpush1.msra.mxu0 0.0
      %345 = vmatprep.subr.mxu0 0.0
      %346 = vmatpush1.msra.mxu0 0.0
      %347 = vmatprep.subr.mxu0 0.0
      %348 = vmatpush1.msra.mxu0 0.0
      %349 = vmatprep.subr.mxu0 0.0
      %350 = vmatpush1.msra.mxu0 0.0
      %351 = vmatprep.subr.mxu0 0.0
      %352 = vmatpush1.msra.mxu0 0.0
      %353 = vmatprep.subr.mxu0 0.0
      %354 = vmatpush1.msra.mxu0 0.0
      %355 = vmatprep.subr.mxu0 0.0
      %356 = vmatpush1.msra.mxu0 0.0
      %357 = vmatprep.subr.mxu0 0.0
      %358 = vmatpush1.msra.mxu0 0.0
      %359 = vmatprep.subr.mxu0 0.0
      %360 = vmatpush1.msra.mxu0 0.0
      %361 = vmatprep.subr.mxu0 0.0
      %362 = vmatpush1.msra.mxu0 0.0
      %363 = vmatprep.subr.mxu0 0.0
      %364 = vmatpush1.msra.mxu0 0.0
      %365 = vmatprep.subr.mxu0 0.0
      %366 = vmatpush1.msra.mxu0 0.0
      %367 = vmatprep.subr.mxu0 0.0
      %368 = vmatpush1.msra.mxu0 0.0
      %369 = vmatprep.subr.mxu0 0.0
      %370 = vmatpush1.msra.mxu0 0.0
      %371 = vmatprep.subr.mxu0 0.0
      %372 = vmatpush1.msra.mxu0 0.0
      %373 = vmatprep.subr.mxu0 0.0
      %374 = vmatpush1.msra.mxu0 0.0
      %375 = vmatprep.subr.mxu0 0.0
      %376 = vmatpush1.msra.mxu0 0.0
      %377 = vmatprep.subr.mxu0 0.0
      %378 = vmatpush1.msra.mxu0 0.0
      %379 = vmatprep.subr.mxu0 0.0
      %380 = vmatpush1.msra.mxu0 0.0
      %381 = vmatprep.subr.mxu0 0.0
      %382 = vmatpush1.msra.mxu0 0.0
      %383 = vmatprep.subr.mxu0 0.0
      %384 = vmatpush1.msra.mxu0 0.0
      %385 = vmatprep.subr.mxu0 0.0
      %386 = vmatpush1.msra.mxu0 0.0
      %387 = vmatprep.subr.mxu0 0.0
      %388 = vmatpush1.msra.mxu0 0.0
      %389 = vmatprep.subr.mxu0 0.0
      %390 = vmatpush1.msra.mxu0 0.0
      %391 = vmatprep.subr.mxu0 0.0
      %392 = vmatpush1.msra.mxu0 0.0
      %393 = vmatprep.subr.mxu0 0.0
      %394 = vmatpush1.msra.mxu0 0.0
      %395 = vmatprep.subr.mxu0 0.0
      %396 = vmatpush1.msra.mxu0 0.0
      %397 = vmatprep.subr.mxu0 0.0
      %398 = vmatpush1.msra.mxu0 0.0
      %399 = vmatprep.subr.mxu0 0.0
      %400 = vmatpush1.msra.mxu0 0.0
      %401 = vmatprep.subr.mxu0 0.0
      %402 = vmatpush1.msra.mxu0 0.0
      %403 = vmatprep.mubr.f32.mxu0 0.0
      %404 = vmatmul.mubr.f32.gmra.mrb[0].mxu0 %v268
      %v405 = vpop.f32.mrb[0].mxu0
      %v406 = vadd.f32 0.0, %v405
      %v407 = vpop.f32.mrb[0].mxu0
      %408 = vmatprep.mubr.f32.mxu0 0.0
      %409 = vmatmul.mubr.f32.gmra.mrb[0].mxu0 %v271
      %v410 = vpop.f32.mrb[0].mxu0
      %v411 = vadd.f32 0.0, %v410
      %v412 = vpop.f32.mrb[0].mxu0
      %413 = vmatprep.mubr.f32.mxu0 0.0
      %414 = vmatmul.mubr.f32.gmra.mrb[0].mxu0 %v274
      %v415 = vpop.f32.mrb[0].mxu0
      %v416 = vpop.f32.mrb[0].mxu0
      %417 = vmatprep.mubr.f32.mxu0 0.0
      %418 = vmatmul.mubr.f32.gmra.mrb[0].mxu0 %v277
      %v419 = vpop.f32.mrb[0].mxu0
      %v420 = vadd.f32 0.0, %v419
      %v421 = vpop.f32.mrb[0].mxu0
      %422 = vmatprep.mubr.f32.mxu0 0.0
      %423 = vmatmul.mubr.f32.gmra.mrb[0].mxu0 %v280
      %v424 = vpop.f32.mrb[0].mxu0
      %v425 = vadd.f32 0.0, %v424
      %v426 = vpop.f32.mrb[0].mxu0
      %427 = vmatprep.mubr.f32.mxu0 0.0
      %428 = vmatmul.mubr.f32.gmra.mrb[0].mxu0 %v283
      %v429 = vpop.f32.mrb[0].mxu0
      %v430 = vpop.f32.mrb[0].mxu0
      %431 = vmatprep.mubr.f32.mxu0 0.0
      %432 = vmatmul.mubr.f32.gmra.mrb[0].mxu0 %v286
      %v433 = vpop.f32.mrb[0].mxu0
      %v434 = vadd.f32 0.0, %v433
      %v435 = vpop.f32.mrb[0].mxu0
      %436 = vmatprep.mubr.f32.mxu0 0.0
      %437 = vmatmul.mubr.f32.gmra.mrb[0].mxu0 %v289
      %v438 = vpop.f32.mrb[0].mxu0
      %v439 = vadd.f32 0.0, %v438
      %v440 = vpop.f32.mrb[0].mxu0
      %441 = vmatprep.mubr.f32.mxu0 0.0
      %442 = vmatmul.mubr.f32.gmra.mrb[0].mxu0 %v292
      %v443 = vpop.f32.mrb[0].mxu0
      %v444 = vpop.f32.mrb[0].mxu0
      %445 = vmatprep.mubr.f32.mxu0 0.0
      %446 = vmatmul.mubr.f32.gmra.mrb[0].mxu0 %v295
      %v447 = vpop.f32.mrb[0].mxu0
      %v448 = vadd.f32 0.0, %v447
      %v449 = vpop.f32.mrb[0].mxu0
      %450 = vmatprep.mubr.f32.mxu0 0.0
      %451 = vmatmul.mubr.f32.gmra.mrb[0].mxu0 %v298
      %v452 = vpop.f32.mrb[0].mxu0
      %v453 = vadd.f32 0.0, %v452
      %v454 = vpop.f32.mrb[0].mxu0
      %455 = vmatprep.mubr.f32.mxu0 0.0
      %456 = vmatmul.mubr.f32.gmra.mrb[0].mxu0 %v301
      %v457 = vpop.f32.mrb[0].mxu0
      %v458 = vpop.f32.mrb[0].mxu0
      %459 = vmatprep.mubr.f32.mxu0 0.0
      %460 = vmatmul.mubr.f32.gmra.mrb[0].mxu0 %v304
      %v461 = vpop.f32.mrb[0].mxu0
      %v462 = vadd.f32 0.0, %v461
      %v463 = vpop.f32.mrb[0].mxu0
      %464 = vmatprep.mubr.f32.mxu0 0.0
      %465 = vmatmul.mubr.f32.gmra.mrb[0].mxu0 %v307
      %v466 = vpop.f32.mrb[0].mxu0
      %v467 = vadd.f32 0.0, %v466
      %v468 = vpop.f32.mrb[0].mxu0
      %469 = vmatprep.mubr.f32.mxu0 0.0
      %470 = vmatmul.mubr.f32.gmra.mrb[0].mxu0 %v310
      %v471 = vpop.f32.mrb[0].mxu0
      %v472 = vpop.f32.mrb[0].mxu0
      %473 = vmatprep.mubr.f32.mxu0 0.0
      %474 = vmatmul.mubr.f32.gmra.mrb[0].mxu0 %v313
      %v475 = vpop.f32.mrb[0].mxu0
      %v476 = vadd.f32 0.0, %v475
      %v477 = vpop.f32.mrb[0].mxu0
      %478 = vmatprep.mubr.f32.mxu0 0.0
      %479 = vmatmul.mubr.f32.gmra.mrb[0].mxu0 %v316
      %v480 = vpop.f32.mrb[0].mxu0
      %v481 = vadd.f32 0.0, %v480
      %v482 = vpop.f32.mrb[0].mxu0
      %483 = vmatprep.mubr.f32.mxu0 0.0
      %484 = vmatmul.mubr.f32.gmra.mrb[0].mxu0 %v319
      %v485 = vpop.f32.mrb[0].mxu0
      %v486 = vpop.f32.mrb[0].mxu0
      %487 = vmatprep.mubr.f32.mxu0 0.0
      %488 = vmatmul.mubr.f32.gmra.mrb[0].mxu0 %v322
      %v489 = vpop.f32.mrb[0].mxu0
      %v490 = vadd.f32 0.0, %v489
      %v491 = vpop.f32.mrb[0].mxu0
      %492 = vmatprep.mubr.f32.mxu0 0.0
      %493 = vmatmul.mubr.f32.gmra.mrb[0].mxu0 %v325
      %v494 = vpop.f32.mrb[0].mxu0
      %v495 = vadd.f32 0.0, %v494
      %v496 = vpop.f32.mrb[0].mxu0
      %497 = vmatprep.mubr.f32.mxu0 0.0
      %498 = vmatmul.mubr.f32.gmra.mrb[0].mxu0 %v328
      %v499 = vpop.f32.mrb[0].mxu0
      %v500 = vpop.f32.mrb[0].mxu0
      %501 = vmatprep.mubr.f32.mxu0 0.0
      %502 = vmatmul.mubr.f32.gmra.mrb[0].mxu0 %v331
      %v503 = vpop.f32.mrb[0].mxu0
      %v504 = vadd.f32 0.0, %v503
      %v505 = vpop.f32.mrb[0].mxu0
      %506 = vmatprep.mubr.f32.mxu0 0.0
      %507 = vmatmul.mubr.f32.gmra.mrb[0].mxu0 %v334
      %v508 = vpop.f32.mrb[0].mxu0
      %v509 = vadd.f32 0.0, %v508
      %v510 = vpop.f32.mrb[0].mxu0
      %511 = vmatprep.mubr.f32.mxu0 0.0
      %512 = vmatmul.mubr.f32.gmra.mrb[0].mxu0 %v337
      %v513 = vpop.f32.mrb[0].mxu0
      %v514 = vpop.f32.mrb[0].mxu0
      %515 = vdwg.mxu0
      %v517 = vsel %vm266, %v182, 0
      %v520 = vsel %vm266, %v183, 0
      %v523 = vsel %vm266, %v184, 0
      %v526 = vsel %vm266, %v185, 0
      %v529 = vsel %vm266, %v186, 0
      %v532 = vsel %vm266, %v187, 0
      %v535 = vsel %vm266, %v188, 0
      %v538 = vsel %vm266, %v189, 0
      %v541 = vsel %vm266, %v190, 0
      %v544 = vsel %vm266, %v191, 0
      %v547 = vsel %vm266, %v192, 0
      %v550 = vsel %vm266, %v193, 0
      %v553 = vsel %vm266, %v194, 0
      %v556 = vsel %vm266, %v195, 0
      %v559 = vsel %vm266, %v196, 0
      %v562 = vsel %vm266, %v197, 0
      %v565 = vsel %vm266, %v198, 0
      %v568 = vsel %vm266, %v199, 0
      %v571 = vsel %vm266, %v200, 0
      %v574 = vsel %vm266, %v201, 0
      %v577 = vsel %vm266, %v202, 0
      %v580 = vsel %vm266, %v203, 0
      %v583 = vsel %vm266, %v204, 0
      %v586 = vsel %vm266, %v205, 0
      %588 = vmatprep.subr.mxu0 0.0
      %589 = vmatpush1.msra.mxu0 %v212
      %590 = vmatprep.subr.mxu0 0.0
      %591 = vmatpush1.msra.mxu0 0.0
      %592 = vmatprep.subr.mxu0 0.0
      %593 = vmatpush1.msra.mxu0 0.0
      %594 = vmatprep.subr.mxu0 0.0
      %595 = vmatpush1.msra.mxu0 0.0
      %596 = vmatprep.subr.mxu0 0.0
      %597 = vmatpush1.msra.mxu0 0.0
      %598 = vmatprep.subr.mxu0 0.0
      %599 = vmatpush1.msra.mxu0 0.0
      %600 = vmatprep.subr.mxu0 0.0
      %601 = vmatpush1.msra.mxu0 0.0
      %602 = vmatprep.subr.mxu0 0.0
      %603 = vmatpush1.msra.mxu0 0.0
      %604 = vmatprep.subr.mxu0 0.0
      %605 = vmatpush1.msra.mxu0 0.0
      %606 = vmatprep.subr.mxu0 0.0
      %607 = vmatpush1.msra.mxu0 0.0
      %608 = vmatprep.subr.mxu0 0.0
      %609 = vmatpush1.msra.mxu0 0.0
      %610 = vmatprep.subr.mxu0 0.0
      %611 = vmatpush1.msra.mxu0 0.0
      %612 = vmatprep.subr.mxu0 0.0
      %613 = vmatpush1.msra.mxu0 0.0
      %614 = vmatprep.subr.mxu0 0.0
      %615 = vmatpush1.msra.mxu0 0.0
      %616 = vmatprep.subr.mxu0 0.0
      %617 = vmatpush1.msra.mxu0 0.0
      %618 = vmatprep.subr.mxu0 0.0
      %619 = vmatpush1.msra.mxu0 0.0
      %620 = vmatprep.subr.mxu0 0.0
      %621 = vmatpush1.msra.mxu0 0.0
      %622 = vmatprep.subr.mxu0 0.0
      %623 = vmatpush1.msra.mxu0 0.0
      %624 = vmatprep.subr.mxu0 0.0
      %625 = vmatpush1.msra.mxu0 0.0
      %626 = vmatprep.subr.mxu0 0.0
      %627 = vmatpush1.msra.mxu0 0.0
      %628 = vmatprep.subr.mxu0 0.0
      %629 = vmatpush1.msra.mxu0 0.0
      %630 = vmatprep.subr.mxu0 0.0
      %631 = vmatpush1.msra.mxu0 0.0
      %632 = vmatprep.subr.mxu0 0.0
      %633 = vmatpush1.msra.mxu0 0.0
      %634 = vmatprep.subr.mxu0 0.0
      %635 = vmatpush1.msra.mxu0 0.0
      %636 = vmatprep.subr.mxu0 0.0
      %637 = vmatpush1.msra.mxu0 0.0
      %638 = vmatprep.subr.mxu0 0.0
      %639 = vmatpush1.msra.mxu0 0.0
      %640 = vmatprep.subr.mxu0 0.0
      %641 = vmatpush1.msra.mxu0 0.0
      %642 = vmatprep.subr.mxu0 0.0
      %643 = vmatpush1.msra.mxu0 0.0
      %644 = vmatprep.subr.mxu0 0.0
      %645 = vmatpush1.msra.mxu0 0.0
      %646 = vmatprep.subr.mxu0 0.0
      %647 = vmatpush1.msra.mxu0 0.0
      %648 = vmatprep.subr.mxu0 0.0
      %649 = vmatpush1.msra.mxu0 0.0
      %650 = vmatprep.subr.mxu0 0.0
      %651 = vmatpush1.msra.mxu0 0.0
      %652 = vmatprep.mubr.f32.mxu0 0.0
      %653 = vmatmul.mubr.f32.gmra.mrb[0].mxu0 %v517
      %v654 = vpop.f32.mrb[0].mxu0
      %v655 = vadd.f32 %v406, %v654
      %v656 = vpop.f32.mrb[0].mxu0
      %657 = vmatprep.mubr.f32.mxu0 0.0
      %658 = vmatmul.mubr.f32.gmra.mrb[0].mxu0 %v520
      %v659 = vpop.f32.mrb[0].mxu0
      %v660 = vadd.f32 %v411, %v659
      %v661 = vpop.f32.mrb[0].mxu0
      %662 = vmatprep.mubr.f32.mxu0 0.0
      %663 = vmatmul.mubr.f32.gmra.mrb[0].mxu0 %v523
      %v664 = vpop.f32.mrb[0].mxu0
      %v665 = vpop.f32.mrb[0].mxu0
      %666 = vmatprep.mubr.f32.mxu0 0.0
      %667 = vmatmul.mubr.f32.gmra.mrb[0].mxu0 %v526
      %v668 = vpop.f32.mrb[0].mxu0
      %v669 = vadd.f32 %v420, %v668
      %v670 = vpop.f32.mrb[0].mxu0
      %671 = vmatprep.mubr.f32.mxu0 0.0
      %672 = vmatmul.mubr.f32.gmra.mrb[0].mxu0 %v529
      %v673 = vpop.f32.mrb[0].mxu0
      %v674 = vadd.f32 %v425, %v673
      %v675 = vpop.f32.mrb[0].mxu0
      %676 = vmatprep.mubr.f32.mxu0 0.0
      %677 = vmatmul.mubr.f32.gmra.mrb[0].mxu0 %v532
      %v678 = vpop.f32.mrb[0].mxu0
      %v679 = vpop.f32.mrb[0].mxu0
      %680 = vmatprep.mubr.f32.mxu0 0.0
      %681 = vmatmul.mubr.f32.gmra.mrb[0].mxu0 %v535
      %v682 = vpop.f32.mrb[0].mxu0
      %v683 = vadd.f32 %v434, %v682
      %v684 = vpop.f32.mrb[0].mxu0
      %685 = vmatprep.mubr.f32.mxu0 0.0
      %686 = vmatmul.mubr.f32.gmra.mrb[0].mxu0 %v538
      %v687 = vpop.f32.mrb[0].mxu0
      %v688 = vadd.f32 %v439, %v687
      %v689 = vpop.f32.mrb[0].mxu0
      %690 = vmatprep.mubr.f32.mxu0 0.0
      %691 = vmatmul.mubr.f32.gmra.mrb[0].mxu0 %v541
      %v692 = vpop.f32.mrb[0].mxu0
      %v693 = vpop.f32.mrb[0].mxu0
      %694 = vmatprep.mubr.f32.mxu0 0.0
      %695 = vmatmul.mubr.f32.gmra.mrb[0].mxu0 %v544
      %v696 = vpop.f32.mrb[0].mxu0
      %v697 = vadd.f32 %v448, %v696
      %v698 = vpop.f32.mrb[0].mxu0
      %699 = vmatprep.mubr.f32.mxu0 0.0
      %700 = vmatmul.mubr.f32.gmra.mrb[0].mxu0 %v547
      %v701 = vpop.f32.mrb[0].mxu0
      %v702 = vadd.f32 %v453, %v701
      %v703 = vpop.f32.mrb[0].mxu0
      %704 = vmatprep.mubr.f32.mxu0 0.0
      %705 = vmatmul.mubr.f32.gmra.mrb[0].mxu0 %v550
      %v706 = vpop.f32.mrb[0].mxu0
      %v707 = vpop.f32.mrb[0].mxu0
      %708 = vmatprep.mubr.f32.mxu0 0.0
      %709 = vmatmul.mubr.f32.gmra.mrb[0].mxu0 %v553
      %v710 = vpop.f32.mrb[0].mxu0
      %v711 = vadd.f32 %v462, %v710
      %v712 = vpop.f32.mrb[0].mxu0
      %713 = vmatprep.mubr.f32.mxu0 0.0
      %714 = vmatmul.mubr.f32.gmra.mrb[0].mxu0 %v556
      %v715 = vpop.f32.mrb[0].mxu0
      %v716 = vadd.f32 %v467, %v715
      %v717 = vpop.f32.mrb[0].mxu0
      %718 = vmatprep.mubr.f32.mxu0 0.0
      %719 = vmatmul.mubr.f32.gmra.mrb[0].mxu0 %v559
      %v720 = vpop.f32.mrb[0].mxu0
      %v721 = vpop.f32.mrb[0].mxu0
      %722 = vmatprep.mubr.f32.mxu0 0.0
      %723 = vmatmul.mubr.f32.gmra.mrb[0].mxu0 %v562
      %v724 = vpop.f32.mrb[0].mxu0
      %v725 = vadd.f32 %v476, %v724
      %v726 = vpop.f32.mrb[0].mxu0
      %727 = vmatprep.mubr.f32.mxu0 0.0
      %728 = vmatmul.mubr.f32.gmra.mrb[0].mxu0 %v565
      %v729 = vpop.f32.mrb[0].mxu0
      %v730 = vadd.f32 %v481, %v729
      %v731 = vpop.f32.mrb[0].mxu0
      %732 = vmatprep.mubr.f32.mxu0 0.0
      %733 = vmatmul.mubr.f32.gmra.mrb[0].mxu0 %v568
      %v734 = vpop.f32.mrb[0].mxu0
      %v735 = vpop.f32.mrb[0].mxu0
      %736 = vmatprep.mubr.f32.mxu0 0.0
      %737 = vmatmul.mubr.f32.gmra.mrb[0].mxu0 %v571
      %v738 = vpop.f32.mrb[0].mxu0
      %v739 = vadd.f32 %v490, %v738
      %v740 = vpop.f32.mrb[0].mxu0
      %741 = vmatprep.mubr.f32.mxu0 0.0
      %742 = vmatmul.mubr.f32.gmra.mrb[0].mxu0 %v574
      %v743 = vpop.f32.mrb[0].mxu0
      %v744 = vadd.f32 %v495, %v743
      %v745 = vpop.f32.mrb[0].mxu0
      %746 = vmatprep.mubr.f32.mxu0 0.0
      %747 = vmatmul.mubr.f32.gmra.mrb[0].mxu0 %v577
      %v748 = vpop.f32.mrb[0].mxu0
      %v749 = vpop.f32.mrb[0].mxu0
      %750 = vmatprep.mubr.f32.mxu0 0.0
      %751 = vmatmul.mubr.f32.gmra.mrb[0].mxu0 %v580
      %v752 = vpop.f32.mrb[0].mxu0
      %v753 = vadd.f32 %v504, %v752
      %v754 = vpop.f32.mrb[0].mxu0
      %755 = vmatprep.mubr.f32.mxu0 0.0
      %756 = vmatmul.mubr.f32.gmra.mrb[0].mxu0 %v583
      %v757 = vpop.f32.mrb[0].mxu0
      %v758 = vadd.f32 %v509, %v757
      %v759 = vpop.f32.mrb[0].mxu0
      %760 = vmatprep.mubr.f32.mxu0 0.0
      %761 = vmatmul.mubr.f32.gmra.mrb[0].mxu0 %v586
      %v762 = vpop.f32.mrb[0].mxu0
      %v763 = vpop.f32.mrb[0].mxu0
      %764 = vdwg.mxu0
      %v765 = vrot.slane %v182, 2
      %v766 = vrot.slane %v183, 2
      %v767 = vrot.slane %v184, 2
      %v768 = vrot.slane %v185, 2
      %v769 = vrot.slane %v186, 2
      %v770 = vrot.slane %v187, 2
      %v771 = vrot.slane %v188, 2
      %v772 = vrot.slane %v189, 2
      %v773 = vrot.slane %v190, 2
      %v774 = vrot.slane %v191, 2
      %v775 = vrot.slane %v192, 2
      %v776 = vrot.slane %v193, 2
      %v777 = vrot.slane %v194, 2
      %v778 = vrot.slane %v195, 2
      %v779 = vrot.slane %v196, 2
      %v780 = vrot.slane %v197, 2
      %v781 = vrot.slane %v198, 2
      %v782 = vrot.slane %v199, 2
      %v783 = vrot.slane %v200, 2
      %v784 = vrot.slane %v201, 2
      %v785 = vrot.slane %v202, 2
      %v786 = vrot.slane %v203, 2
      %v787 = vrot.slane %v204, 2
      %v788 = vrot.slane %v205, 2
      %vm789 = vcmp.lt.s32.totalorder %v238, 6
      %v790 = vsel %vm789, %v787, %v788
      %v791 = vsel %vm789, %v786, %v787
      %v792 = vsel %vm789, %v785, %v786
      %v793 = vsel %vm789, %v784, %v785
      %v794 = vsel %vm789, %v783, %v784
      %v795 = vsel %vm789, %v782, %v783
      %v796 = vsel %vm789, %v781, %v782
      %v797 = vsel %vm789, %v780, %v781
      %v798 = vsel %vm789, %v779, %v780
      %v799 = vsel %vm789, %v778, %v779
      %v800 = vsel %vm789, %v777, %v778
      %v801 = vsel %vm789, %v776, %v777
      %v802 = vsel %vm789, %v775, %v776
      %v803 = vsel %vm789, %v774, %v775
      %v804 = vsel %vm789, %v773, %v774
      %v805 = vsel %vm789, %v772, %v773
      %v806 = vsel %vm789, %v771, %v772
      %v807 = vsel %vm789, %v770, %v771
      %v808 = vsel %vm789, %v769, %v770
      %v809 = vsel %vm789, %v768, %v769
      %v810 = vsel %vm789, %v767, %v768
      %v811 = vsel %vm789, %v766, %v767
      %v812 = vsel %vm789, %v765, %v766
      %v813 = vsel %vm789, %v788, %v765
      %s814 = scalar_lea.vmem %s1, 16
      %v815 = vld [vmem:[%s814] sm:$0xff]
      %v817 = vsel %vm266, %v812, 0
      %v820 = vsel %vm266, %v811, 0
      %v823 = vsel %vm266, %v810, 0
      %v826 = vsel %vm266, %v809, 0
      %v829 = vsel %vm266, %v808, 0
      %v832 = vsel %vm266, %v807, 0
      %v835 = vsel %vm266, %v806, 0
      %v838 = vsel %vm266, %v805, 0
      %v841 = vsel %vm266, %v804, 0
      %v844 = vsel %vm266, %v803, 0
      %v847 = vsel %vm266, %v802, 0
      %v850 = vsel %vm266, %v801, 0
      %v853 = vsel %vm266, %v800, 0
      %v856 = vsel %vm266, %v799, 0
      %v859 = vsel %vm266, %v798, 0
      %v862 = vsel %vm266, %v797, 0
      %v865 = vsel %vm266, %v796, 0
      %v868 = vsel %vm266, %v795, 0
      %v871 = vsel %vm266, %v794, 0
      %v874 = vsel %vm266, %v793, 0
      %v877 = vsel %vm266, %v792, 0
      %v880 = vsel %vm266, %v791, 0
      %v883 = vsel %vm266, %v790, 0
      %v886 = vsel %vm266, %v813, 0
      %888 = vmatprep.subr.mxu0 0.0
      %889 = vmatpush1.msra.mxu0 %v815
      %890 = vmatprep.subr.mxu0 0.0
      %891 = vmatpush1.msra.mxu0 0.0
      %892 = vmatprep.subr.mxu0 0.0
      %893 = vmatpush1.msra.mxu0 0.0
      %894 = vmatprep.subr.mxu0 0.0
      %895 = vmatpush1.msra.mxu0 0.0
      %896 = vmatprep.subr.mxu0 0.0
      %897 = vmatpush1.msra.mxu0 0.0
      %898 = vmatprep.subr.mxu0 0.0
      %899 = vmatpush1.msra.mxu0 0.0
      %900 = vmatprep.subr.mxu0 0.0
      %901 = vmatpush1.msra.mxu0 0.0
      %902 = vmatprep.subr.mxu0 0.0
      %903 = vmatpush1.msra.mxu0 0.0
      %904 = vmatprep.subr.mxu0 0.0
      %905 = vmatpush1.msra.mxu0 0.0
      %906 = vmatprep.subr.mxu0 0.0
      %907 = vmatpush1.msra.mxu0 0.0
      %908 = vmatprep.subr.mxu0 0.0
      %909 = vmatpush1.msra.mxu0 0.0
      %910 = vmatprep.subr.mxu0 0.0
      %911 = vmatpush1.msra.mxu0 0.0
      %912 = vmatprep.subr.mxu0 0.0
      %913 = vmatpush1.msra.mxu0 0.0
      %914 = vmatprep.subr.mxu0 0.0
      %915 = vmatpush1.msra.mxu0 0.0
      %916 = vmatprep.subr.mxu0 0.0
      %917 = vmatpush1.msra.mxu0 0.0
      %918 = vmatprep.subr.mxu0 0.0
      %919 = vmatpush1.msra.mxu0 0.0
      %920 = vmatprep.subr.mxu0 0.0
      %921 = vmatpush1.msra.mxu0 0.0
      %922 = vmatprep.subr.mxu0 0.0
      %923 = vmatpush1.msra.mxu0 0.0
      %924 = vmatprep.subr.mxu0 0.0
      %925 = vmatpush1.msra.mxu0 0.0
      %926 = vmatprep.subr.mxu0 0.0
      %927 = vmatpush1.msra.mxu0 0.0
      %928 = vmatprep.subr.mxu0 0.0
      %929 = vmatpush1.msra.mxu0 0.0
      %930 = vmatprep.subr.mxu0 0.0
      %931 = vmatpush1.msra.mxu0 0.0
      %932 = vmatprep.subr.mxu0 0.0
      %933 = vmatpush1.msra.mxu0 0.0
      %934 = vmatprep.subr.mxu0 0.0
      %935 = vmatpush1.msra.mxu0 0.0
      %936 = vmatprep.subr.mxu0 0.0
      %937 = vmatpush1.msra.mxu0 0.0
      %938 = vmatprep.subr.mxu0 0.0
      %939 = vmatpush1.msra.mxu0 0.0
      %940 = vmatprep.subr.mxu0 0.0
      %941 = vmatpush1.msra.mxu0 0.0
      %942 = vmatprep.subr.mxu0 0.0
      %943 = vmatpush1.msra.mxu0 0.0
      %944 = vmatprep.subr.mxu0 0.0
      %945 = vmatpush1.msra.mxu0 0.0
      %946 = vmatprep.subr.mxu0 0.0
      %947 = vmatpush1.msra.mxu0 0.0
      %948 = vmatprep.subr.mxu0 0.0
      %949 = vmatpush1.msra.mxu0 0.0
      %950 = vmatprep.subr.mxu0 0.0
      %951 = vmatpush1.msra.mxu0 0.0
      %952 = vmatprep.mubr.f32.mxu0 0.0
      %953 = vmatmul.mubr.f32.gmra.mrb[0].mxu0 %v817
      %v954 = vpop.f32.mrb[0].mxu0
      %v955 = vadd.f32 0.0, %v954
      %v956 = vpop.f32.mrb[0].mxu0
      %957 = vmatprep.mubr.f32.mxu0 0.0
      %958 = vmatmul.mubr.f32.gmra.mrb[0].mxu0 %v820
      %v959 = vpop.f32.mrb[0].mxu0
      %v960 = vadd.f32 0.0, %v959
      %v961 = vpop.f32.mrb[0].mxu0
      %962 = vmatprep.mubr.f32.mxu0 0.0
      %963 = vmatmul.mubr.f32.gmra.mrb[0].mxu0 %v823
      %v964 = vpop.f32.mrb[0].mxu0
      %v965 = vpop.f32.mrb[0].mxu0
      %966 = vmatprep.mubr.f32.mxu0 0.0
      %967 = vmatmul.mubr.f32.gmra.mrb[0].mxu0 %v826
      %v968 = vpop.f32.mrb[0].mxu0
      %v969 = vadd.f32 0.0, %v968
      %v970 = vpop.f32.mrb[0].mxu0
      %971 = vmatprep.mubr.f32.mxu0 0.0
      %972 = vmatmul.mubr.f32.gmra.mrb[0].mxu0 %v829
      %v973 = vpop.f32.mrb[0].mxu0
      %v974 = vadd.f32 0.0, %v973
      %v975 = vpop.f32.mrb[0].mxu0
      %976 = vmatprep.mubr.f32.mxu0 0.0
      %977 = vmatmul.mubr.f32.gmra.mrb[0].mxu0 %v832
      %v978 = vpop.f32.mrb[0].mxu0
      %v979 = vpop.f32.mrb[0].mxu0
      %980 = vmatprep.mubr.f32.mxu0 0.0
      %981 = vmatmul.mubr.f32.gmra.mrb[0].mxu0 %v835
      %v982 = vpop.f32.mrb[0].mxu0
      %v983 = vadd.f32 0.0, %v982
      %v984 = vpop.f32.mrb[0].mxu0
      %985 = vmatprep.mubr.f32.mxu0 0.0
      %986 = vmatmul.mubr.f32.gmra.mrb[0].mxu0 %v838
      %v987 = vpop.f32.mrb[0].mxu0
      %v988 = vadd.f32 0.0, %v987
      %v989 = vpop.f32.mrb[0].mxu0
      %990 = vmatprep.mubr.f32.mxu0 0.0
      %991 = vmatmul.mubr.f32.gmra.mrb[0].mxu0 %v841
      %v992 = vpop.f32.mrb[0].mxu0
      %v993 = vpop.f32.mrb[0].mxu0
      %994 = vmatprep.mubr.f32.mxu0 0.0
      %995 = vmatmul.mubr.f32.gmra.mrb[0].mxu0 %v844
      %v996 = vpop.f32.mrb[0].mxu0
      %v997 = vadd.f32 0.0, %v996
      %v998 = vpop.f32.mrb[0].mxu0
      %999 = vmatprep.mubr.f32.mxu0 0.0
      %1000 = vmatmul.mubr.f32.gmra.mrb[0].mxu0 %v847
      %v1001 = vpop.f32.mrb[0].mxu0
      %v1002 = vadd.f32 0.0, %v1001
      %v1003 = vpop.f32.mrb[0].mxu0
      %1004 = vmatprep.mubr.f32.mxu0 0.0
      %1005 = vmatmul.mubr.f32.gmra.mrb[0].mxu0 %v850
      %v1006 = vpop.f32.mrb[0].mxu0
      %v1007 = vpop.f32.mrb[0].mxu0
      %1008 = vmatprep.mubr.f32.mxu0 0.0
      %1009 = vmatmul.mubr.f32.gmra.mrb[0].mxu0 %v853
      %v1010 = vpop.f32.mrb[0].mxu0
      %v1011 = vadd.f32 0.0, %v1010
      %v1012 = vpop.f32.mrb[0].mxu0
      %1013 = vmatprep.mubr.f32.mxu0 0.0
      %1014 = vmatmul.mubr.f32.gmra.mrb[0].mxu0 %v856
      %v1015 = vpop.f32.mrb[0].mxu0
      %v1016 = vadd.f32 0.0, %v1015
      %v1017 = vpop.f32.mrb[0].mxu0
      %1018 = vmatprep.mubr.f32.mxu0 0.0
      %1019 = vmatmul.mubr.f32.gmra.mrb[0].mxu0 %v859
      %v1020 = vpop.f32.mrb[0].mxu0
      %v1021 = vpop.f32.mrb[0].mxu0
      %1022 = vmatprep.mubr.f32.mxu0 0.0
      %1023 = vmatmul.mubr.f32.gmra.mrb[0].mxu0 %v862
      %v1024 = vpop.f32.mrb[0].mxu0
      %v1025 = vadd.f32 0.0, %v1024
      %v1026 = vpop.f32.mrb[0].mxu0
      %1027 = vmatprep.mubr.f32.mxu0 0.0
      %1028 = vmatmul.mubr.f32.gmra.mrb[0].mxu0 %v865
      %v1029 = vpop.f32.mrb[0].mxu0
      %v1030 = vadd.f32 0.0, %v1029
      %v1031 = vpop.f32.mrb[0].mxu0
      %1032 = vmatprep.mubr.f32.mxu0 0.0
      %1033 = vmatmul.mubr.f32.gmra.mrb[0].mxu0 %v868
      %v1034 = vpop.f32.mrb[0].mxu0
      %v1035 = vpop.f32.mrb[0].mxu0
      %1036 = vmatprep.mubr.f32.mxu0 0.0
      %1037 = vmatmul.mubr.f32.gmra.mrb[0].mxu0 %v871
      %v1038 = vpop.f32.mrb[0].mxu0
      %v1039 = vadd.f32 0.0, %v1038
      %v1040 = vpop.f32.mrb[0].mxu0
      %1041 = vmatprep.mubr.f32.mxu0 0.0
      %1042 = vmatmul.mubr.f32.gmra.mrb[0].mxu0 %v874
      %v1043 = vpop.f32.mrb[0].mxu0
      %v1044 = vadd.f32 0.0, %v1043
      %v1045 = vpop.f32.mrb[0].mxu0
      %1046 = vmatprep.mubr.f32.mxu0 0.0
      %1047 = vmatmul.mubr.f32.gmra.mrb[0].mxu0 %v877
      %v1048 = vpop.f32.mrb[0].mxu0
      %v1049 = vpop.f32.mrb[0].mxu0
      %1050 = vmatprep.mubr.f32.mxu0 0.0
      %1051 = vmatmul.mubr.f32.gmra.mrb[0].mxu0 %v880
      %v1052 = vpop.f32.mrb[0].mxu0
      %v1053 = vadd.f32 0.0, %v1052
      %v1054 = vpop.f32.mrb[0].mxu0
      %1055 = vmatprep.mubr.f32.mxu0 0.0
      %1056 = vmatmul.mubr.f32.gmra.mrb[0].mxu0 %v883
      %v1057 = vpop.f32.mrb[0].mxu0
      %v1058 = vadd.f32 0.0, %v1057
      %v1059 = vpop.f32.mrb[0].mxu0
      %1060 = vmatprep.mubr.f32.mxu0 0.0
      %1061 = vmatmul.mubr.f32.gmra.mrb[0].mxu0 %v886
      %v1062 = vpop.f32.mrb[0].mxu0
      %v1063 = vpop.f32.mrb[0].mxu0
      %1064 = vdwg.mxu0
      %v1065 = vadd.f32 %v655, %v955
      %v1066 = vadd.f32 %v660, %v960
      %v1067 = vadd.f32 %v669, %v969
      %v1068 = vadd.f32 %v674, %v974
      %v1069 = vadd.f32 %v683, %v983
      %v1070 = vadd.f32 %v688, %v988
      %v1071 = vadd.f32 %v697, %v997
      %v1072 = vadd.f32 %v702, %v1002
      %v1073 = vadd.f32 %v711, %v1011
      %v1074 = vadd.f32 %v716, %v1016
      %v1075 = vadd.f32 %v725, %v1025
      %v1076 = vadd.f32 %v730, %v1030
      %v1077 = vadd.f32 %v739, %v1039
      %v1078 = vadd.f32 %v744, %v1044
      %v1079 = vadd.f32 %v753, %v1053
      %v1080 = vadd.f32 %v758, %v1058
      %s1081 = scalar_lea.vmem %s1, 24
      %v1082 = vld [vmem:[%s1081] sm:$0xff]
      %v1084 = vsel %vm266, %v206, 0
      %v1087 = vsel %vm266, %v207, 0
      %v1090 = vsel %vm266, %v208, 0
      %1092 = vmatprep.subr.mxu0 0.0
      %1093 = vmatpush1.msra.mxu0 %v1082
      %1094 = vmatprep.subr.mxu0 0.0
      %1095 = vmatpush1.msra.mxu0 0.0
      %1096 = vmatprep.subr.mxu0 0.0
      %1097 = vmatpush1.msra.mxu0 0.0
      %1098 = vmatprep.subr.mxu0 0.0
      %1099 = vmatpush1.msra.mxu0 0.0
      %1100 = vmatprep.subr.mxu0 0.0
      %1101 = vmatpush1.msra.mxu0 0.0
      %1102 = vmatprep.subr.mxu0 0.0
      %1103 = vmatpush1.msra.mxu0 0.0
      %1104 = vmatprep.subr.mxu0 0.0
      %1105 = vmatpush1.msra.mxu0 0.0
      %1106 = vmatprep.subr.mxu0 0.0
      %1107 = vmatpush1.msra.mxu0 0.0
      %1108 = vmatprep.subr.mxu0 0.0
      %1109 = vmatpush1.msra.mxu0 0.0
      %1110 = vmatprep.subr.mxu0 0.0
      %1111 = vmatpush1.msra.mxu0 0.0
      %1112 = vmatprep.subr.mxu0 0.0
      %1113 = vmatpush1.msra.mxu0 0.0
      %1114 = vmatprep.subr.mxu0 0.0
      %1115 = vmatpush1.msra.mxu0 0.0
      %1116 = vmatprep.subr.mxu0 0.0
      %1117 = vmatpush1.msra.mxu0 0.0
      %1118 = vmatprep.subr.mxu0 0.0
      %1119 = vmatpush1.msra.mxu0 0.0
      %1120 = vmatprep.subr.mxu0 0.0
      %1121 = vmatpush1.msra.mxu0 0.0
      %1122 = vmatprep.subr.mxu0 0.0
      %1123 = vmatpush1.msra.mxu0 0.0
      %1124 = vmatprep.subr.mxu0 0.0
      %1125 = vmatpush1.msra.mxu0 0.0
      %1126 = vmatprep.subr.mxu0 0.0
      %1127 = vmatpush1.msra.mxu0 0.0
      %1128 = vmatprep.subr.mxu0 0.0
      %1129 = vmatpush1.msra.mxu0 0.0
      %1130 = vmatprep.subr.mxu0 0.0
      %1131 = vmatpush1.msra.mxu0 0.0
      %1132 = vmatprep.subr.mxu0 0.0
      %1133 = vmatpush1.msra.mxu0 0.0
      %1134 = vmatprep.subr.mxu0 0.0
      %1135 = vmatpush1.msra.mxu0 0.0
      %1136 = vmatprep.subr.mxu0 0.0
      %1137 = vmatpush1.msra.mxu0 0.0
      %1138 = vmatprep.subr.mxu0 0.0
      %1139 = vmatpush1.msra.mxu0 0.0
      %1140 = vmatprep.subr.mxu0 0.0
      %1141 = vmatpush1.msra.mxu0 0.0
      %1142 = vmatprep.subr.mxu0 0.0
      %1143 = vmatpush1.msra.mxu0 0.0
      %1144 = vmatprep.subr.mxu0 0.0
      %1145 = vmatpush1.msra.mxu0 0.0
      %1146 = vmatprep.subr.mxu0 0.0
      %1147 = vmatpush1.msra.mxu0 0.0
      %1148 = vmatprep.subr.mxu0 0.0
      %1149 = vmatpush1.msra.mxu0 0.0
      %1150 = vmatprep.subr.mxu0 0.0
      %1151 = vmatpush1.msra.mxu0 0.0
      %1152 = vmatprep.subr.mxu0 0.0
      %1153 = vmatpush1.msra.mxu0 0.0
      %1154 = vmatprep.subr.mxu0 0.0
      %1155 = vmatpush1.msra.mxu0 0.0
      %1156 = vmatprep.mubr.f32.mxu0 0.0
      %1157 = vmatmul.mubr.f32.gmra.mrb[0].mxu0 %v526
      %v1158 = vpop.f32.mrb[0].mxu0
      %v1159 = vadd.f32 0.0, %v1158
      %v1160 = vpop.f32.mrb[0].mxu0
      %1161 = vmatprep.mubr.f32.mxu0 0.0
      %1162 = vmatmul.mubr.f32.gmra.mrb[0].mxu0 %v529
      %v1163 = vpop.f32.mrb[0].mxu0
      %v1164 = vadd.f32 0.0, %v1163
      %v1165 = vpop.f32.mrb[0].mxu0
      %1166 = vmatprep.mubr.f32.mxu0 0.0
      %1167 = vmatmul.mubr.f32.gmra.mrb[0].mxu0 %v532
      %v1168 = vpop.f32.mrb[0].mxu0
      %v1169 = vpop.f32.mrb[0].mxu0
      %1170 = vmatprep.mubr.f32.mxu0 0.0
      %1171 = vmatmul.mubr.f32.gmra.mrb[0].mxu0 %v535
      %v1172 = vpop.f32.mrb[0].mxu0
      %v1173 = vadd.f32 0.0, %v1172
      %v1174 = vpop.f32.mrb[0].mxu0
      %1175 = vmatprep.mubr.f32.mxu0 0.0
      %1176 = vmatmul.mubr.f32.gmra.mrb[0].mxu0 %v538
      %v1177 = vpop.f32.mrb[0].mxu0
      %v1178 = vadd.f32 0.0, %v1177
      %v1179 = vpop.f32.mrb[0].mxu0
      %1180 = vmatprep.mubr.f32.mxu0 0.0
      %1181 = vmatmul.mubr.f32.gmra.mrb[0].mxu0 %v541
      %v1182 = vpop.f32.mrb[0].mxu0
      %v1183 = vpop.f32.mrb[0].mxu0
      %1184 = vmatprep.mubr.f32.mxu0 0.0
      %1185 = vmatmul.mubr.f32.gmra.mrb[0].mxu0 %v544
      %v1186 = vpop.f32.mrb[0].mxu0
      %v1187 = vadd.f32 0.0, %v1186
      %v1188 = vpop.f32.mrb[0].mxu0
      %1189 = vmatprep.mubr.f32.mxu0 0.0
      %1190 = vmatmul.mubr.f32.gmra.mrb[0].mxu0 %v547
      %v1191 = vpop.f32.mrb[0].mxu0
      %v1192 = vadd.f32 0.0, %v1191
      %v1193 = vpop.f32.mrb[0].mxu0
      %1194 = vmatprep.mubr.f32.mxu0 0.0
      %1195 = vmatmul.mubr.f32.gmra.mrb[0].mxu0 %v550
      %v1196 = vpop.f32.mrb[0].mxu0
      %v1197 = vpop.f32.mrb[0].mxu0
      %1198 = vmatprep.mubr.f32.mxu0 0.0
      %1199 = vmatmul.mubr.f32.gmra.mrb[0].mxu0 %v553
      %v1200 = vpop.f32.mrb[0].mxu0
      %v1201 = vadd.f32 0.0, %v1200
      %v1202 = vpop.f32.mrb[0].mxu0
      %1203 = vmatprep.mubr.f32.mxu0 0.0
      %1204 = vmatmul.mubr.f32.gmra.mrb[0].mxu0 %v556
      %v1205 = vpop.f32.mrb[0].mxu0
      %v1206 = vadd.f32 0.0, %v1205
      %v1207 = vpop.f32.mrb[0].mxu0
      %1208 = vmatprep.mubr.f32.mxu0 0.0
      %1209 = vmatmul.mubr.f32.gmra.mrb[0].mxu0 %v559
      %v1210 = vpop.f32.mrb[0].mxu0
      %v1211 = vpop.f32.mrb[0].mxu0
      %1212 = vmatprep.mubr.f32.mxu0 0.0
      %1213 = vmatmul.mubr.f32.gmra.mrb[0].mxu0 %v562
      %v1214 = vpop.f32.mrb[0].mxu0
      %v1215 = vadd.f32 0.0, %v1214
      %v1216 = vpop.f32.mrb[0].mxu0
      %1217 = vmatprep.mubr.f32.mxu0 0.0
      %1218 = vmatmul.mubr.f32.gmra.mrb[0].mxu0 %v565
      %v1219 = vpop.f32.mrb[0].mxu0
      %v1220 = vadd.f32 0.0, %v1219
      %v1221 = vpop.f32.mrb[0].mxu0
      %1222 = vmatprep.mubr.f32.mxu0 0.0
      %1223 = vmatmul.mubr.f32.gmra.mrb[0].mxu0 %v568
      %v1224 = vpop.f32.mrb[0].mxu0
      %v1225 = vpop.f32.mrb[0].mxu0
      %1226 = vmatprep.mubr.f32.mxu0 0.0
      %1227 = vmatmul.mubr.f32.gmra.mrb[0].mxu0 %v571
      %v1228 = vpop.f32.mrb[0].mxu0
      %v1229 = vadd.f32 0.0, %v1228
      %v1230 = vpop.f32.mrb[0].mxu0
      %1231 = vmatprep.mubr.f32.mxu0 0.0
      %1232 = vmatmul.mubr.f32.gmra.mrb[0].mxu0 %v574
      %v1233 = vpop.f32.mrb[0].mxu0
      %v1234 = vadd.f32 0.0, %v1233
      %v1235 = vpop.f32.mrb[0].mxu0
      %1236 = vmatprep.mubr.f32.mxu0 0.0
      %1237 = vmatmul.mubr.f32.gmra.mrb[0].mxu0 %v577
      %v1238 = vpop.f32.mrb[0].mxu0
      %v1239 = vpop.f32.mrb[0].mxu0
      %1240 = vmatprep.mubr.f32.mxu0 0.0
      %1241 = vmatmul.mubr.f32.gmra.mrb[0].mxu0 %v580
      %v1242 = vpop.f32.mrb[0].mxu0
      %v1243 = vadd.f32 0.0, %v1242
      %v1244 = vpop.f32.mrb[0].mxu0
      %1245 = vmatprep.mubr.f32.mxu0 0.0
      %1246 = vmatmul.mubr.f32.gmra.mrb[0].mxu0 %v583
      %v1247 = vpop.f32.mrb[0].mxu0
      %v1248 = vadd.f32 0.0, %v1247
      %v1249 = vpop.f32.mrb[0].mxu0
      %1250 = vmatprep.mubr.f32.mxu0 0.0
      %1251 = vmatmul.mubr.f32.gmra.mrb[0].mxu0 %v586
      %v1252 = vpop.f32.mrb[0].mxu0
      %v1253 = vpop.f32.mrb[0].mxu0
      %1254 = vmatprep.mubr.f32.mxu0 0.0
      %1255 = vmatmul.mubr.f32.gmra.mrb[0].mxu0 %v1084
      %v1256 = vpop.f32.mrb[0].mxu0
      %v1257 = vadd.f32 0.0, %v1256
      %v1258 = vpop.f32.mrb[0].mxu0
      %1259 = vmatprep.mubr.f32.mxu0 0.0
      %1260 = vmatmul.mubr.f32.gmra.mrb[0].mxu0 %v1087
      %v1261 = vpop.f32.mrb[0].mxu0
      %v1262 = vadd.f32 0.0, %v1261
      %v1263 = vpop.f32.mrb[0].mxu0
      %1264 = vmatprep.mubr.f32.mxu0 0.0
      %1265 = vmatmul.mubr.f32.gmra.mrb[0].mxu0 %v1090
      %v1266 = vpop.f32.mrb[0].mxu0
      %v1267 = vpop.f32.mrb[0].mxu0
      %1268 = vdwg.mxu0
      %v1269 = vadd.f32 %v1065, %v1159
      %v1270 = vadd.f32 %v1066, %v1164
      %v1271 = vadd.f32 %v1067, %v1173
      %v1272 = vadd.f32 %v1068, %v1178
      %v1273 = vadd.f32 %v1069, %v1187
      %v1274 = vadd.f32 %v1070, %v1192
      %v1275 = vadd.f32 %v1071, %v1201
      %v1276 = vadd.f32 %v1072, %v1206
      %v1277 = vadd.f32 %v1073, %v1215
      %v1278 = vadd.f32 %v1074, %v1220
      %v1279 = vadd.f32 %v1075, %v1229
      %v1280 = vadd.f32 %v1076, %v1234
      %v1281 = vadd.f32 %v1077, %v1243
      %v1282 = vadd.f32 %v1078, %v1248
      %v1283 = vadd.f32 %v1079, %v1257
      %v1284 = vadd.f32 %v1080, %v1262
      %v1285 = vrot.slane %v206, 1
      %v1286 = vrot.slane %v207, 1
      %v1287 = vrot.slane %v208, 1
      %v1288 = vsel %vm239, %v1286, %v1287
      %v1289 = vsel %vm239, %v1285, %v1286
      %v1290 = vsel %vm239, %v236, %v1285
      %v1291 = vsel %vm239, %v1287, %v216
      %s1292 = scalar_lea.vmem %s1, 32
      %v1293 = vld [vmem:[%s1292] sm:$0xff]
      %v1295 = vsel %vm266, %v1290, 0
      %v1298 = vsel %vm266, %v1289, 0
      %v1301 = vsel %vm266, %v1288, 0
      %v1304 = vsel %vm266, %v1291, 0
      %1306 = vmatprep.subr.mxu0 0.0
      %1307 = vmatpush1.msra.mxu0 %v1293
      %1308 = vmatprep.subr.mxu0 0.0
      %1309 = vmatpush1.msra.mxu0 0.0
      %1310 = vmatprep.subr.mxu0 0.0
      %1311 = vmatpush1.msra.mxu0 0.0
      %1312 = vmatprep.subr.mxu0 0.0
      %1313 = vmatpush1.msra.mxu0 0.0
      %1314 = vmatprep.subr.mxu0 0.0
      %1315 = vmatpush1.msra.mxu0 0.0
      %1316 = vmatprep.subr.mxu0 0.0
      %1317 = vmatpush1.msra.mxu0 0.0
      %1318 = vmatprep.subr.mxu0 0.0
      %1319 = vmatpush1.msra.mxu0 0.0
      %1320 = vmatprep.subr.mxu0 0.0
      %1321 = vmatpush1.msra.mxu0 0.0
      %1322 = vmatprep.subr.mxu0 0.0
      %1323 = vmatpush1.msra.mxu0 0.0
      %1324 = vmatprep.subr.mxu0 0.0
      %1325 = vmatpush1.msra.mxu0 0.0
      %1326 = vmatprep.subr.mxu0 0.0
      %1327 = vmatpush1.msra.mxu0 0.0
      %1328 = vmatprep.subr.mxu0 0.0
      %1329 = vmatpush1.msra.mxu0 0.0
      %1330 = vmatprep.subr.mxu0 0.0
      %1331 = vmatpush1.msra.mxu0 0.0
      %1332 = vmatprep.subr.mxu0 0.0
      %1333 = vmatpush1.msra.mxu0 0.0
      %1334 = vmatprep.subr.mxu0 0.0
      %1335 = vmatpush1.msra.mxu0 0.0
      %1336 = vmatprep.subr.mxu0 0.0
      %1337 = vmatpush1.msra.mxu0 0.0
      %1338 = vmatprep.subr.mxu0 0.0
      %1339 = vmatpush1.msra.mxu0 0.0
      %1340 = vmatprep.subr.mxu0 0.0
      %1341 = vmatpush1.msra.mxu0 0.0
      %1342 = vmatprep.subr.mxu0 0.0
      %1343 = vmatpush1.msra.mxu0 0.0
      %1344 = vmatprep.subr.mxu0 0.0
      %1345 = vmatpush1.msra.mxu0 0.0
      %1346 = vmatprep.subr.mxu0 0.0
      %1347 = vmatpush1.msra.mxu0 0.0
      %1348 = vmatprep.subr.mxu0 0.0
      %1349 = vmatpush1.msra.mxu0 0.0
      %1350 = vmatprep.subr.mxu0 0.0
      %1351 = vmatpush1.msra.mxu0 0.0
      %1352 = vmatprep.subr.mxu0 0.0
      %1353 = vmatpush1.msra.mxu0 0.0
      %1354 = vmatprep.subr.mxu0 0.0
      %1355 = vmatpush1.msra.mxu0 0.0
      %1356 = vmatprep.subr.mxu0 0.0
      %1357 = vmatpush1.msra.mxu0 0.0
      %1358 = vmatprep.subr.mxu0 0.0
      %1359 = vmatpush1.msra.mxu0 0.0
      %1360 = vmatprep.subr.mxu0 0.0
      %1361 = vmatpush1.msra.mxu0 0.0
      %1362 = vmatprep.subr.mxu0 0.0
      %1363 = vmatpush1.msra.mxu0 0.0
      %1364 = vmatprep.subr.mxu0 0.0
      %1365 = vmatpush1.msra.mxu0 0.0
      %1366 = vmatprep.subr.mxu0 0.0
      %1367 = vmatpush1.msra.mxu0 0.0
      %1368 = vmatprep.subr.mxu0 0.0
      %1369 = vmatpush1.msra.mxu0 0.0
      %1370 = vmatprep.mubr.f32.mxu0 0.0
      %1371 = vmatmul.mubr.f32.gmra.mrb[0].mxu0 %v277
      %v1372 = vpop.f32.mrb[0].mxu0
      %v1373 = vadd.f32 0.0, %v1372
      %v1374 = vpop.f32.mrb[0].mxu0
      %1375 = vmatprep.mubr.f32.mxu0 0.0
      %1376 = vmatmul.mubr.f32.gmra.mrb[0].mxu0 %v280
      %v1377 = vpop.f32.mrb[0].mxu0
      %v1378 = vadd.f32 0.0, %v1377
      %v1379 = vpop.f32.mrb[0].mxu0
      %1380 = vmatprep.mubr.f32.mxu0 0.0
      %1381 = vmatmul.mubr.f32.gmra.mrb[0].mxu0 %v283
      %v1382 = vpop.f32.mrb[0].mxu0
      %v1383 = vpop.f32.mrb[0].mxu0
      %1384 = vmatprep.mubr.f32.mxu0 0.0
      %1385 = vmatmul.mubr.f32.gmra.mrb[0].mxu0 %v286
      %v1386 = vpop.f32.mrb[0].mxu0
      %v1387 = vadd.f32 0.0, %v1386
      %v1388 = vpop.f32.mrb[0].mxu0
      %1389 = vmatprep.mubr.f32.mxu0 0.0
      %1390 = vmatmul.mubr.f32.gmra.mrb[0].mxu0 %v289
      %v1391 = vpop.f32.mrb[0].mxu0
      %v1392 = vadd.f32 0.0, %v1391
      %v1393 = vpop.f32.mrb[0].mxu0
      %1394 = vmatprep.mubr.f32.mxu0 0.0
      %1395 = vmatmul.mubr.f32.gmra.mrb[0].mxu0 %v292
      %v1396 = vpop.f32.mrb[0].mxu0
      %v1397 = vpop.f32.mrb[0].mxu0
      %1398 = vmatprep.mubr.f32.mxu0 0.0
      %1399 = vmatmul.mubr.f32.gmra.mrb[0].mxu0 %v295
      %v1400 = vpop.f32.mrb[0].mxu0
      %v1401 = vadd.f32 0.0, %v1400
      %v1402 = vpop.f32.mrb[0].mxu0
      %1403 = vmatprep.mubr.f32.mxu0 0.0
      %1404 = vmatmul.mubr.f32.gmra.mrb[0].mxu0 %v298
      %v1405 = vpop.f32.mrb[0].mxu0
      %v1406 = vadd.f32 0.0, %v1405
      %v1407 = vpop.f32.mrb[0].mxu0
      %1408 = vmatprep.mubr.f32.mxu0 0.0
      %1409 = vmatmul.mubr.f32.gmra.mrb[0].mxu0 %v301
      %v1410 = vpop.f32.mrb[0].mxu0
      %v1411 = vpop.f32.mrb[0].mxu0
      %1412 = vmatprep.mubr.f32.mxu0 0.0
      %1413 = vmatmul.mubr.f32.gmra.mrb[0].mxu0 %v304
      %v1414 = vpop.f32.mrb[0].mxu0
      %v1415 = vadd.f32 0.0, %v1414
      %v1416 = vpop.f32.mrb[0].mxu0
      %1417 = vmatprep.mubr.f32.mxu0 0.0
      %1418 = vmatmul.mubr.f32.gmra.mrb[0].mxu0 %v307
      %v1419 = vpop.f32.mrb[0].mxu0
      %v1420 = vadd.f32 0.0, %v1419
      %v1421 = vpop.f32.mrb[0].mxu0
      %1422 = vmatprep.mubr.f32.mxu0 0.0
      %1423 = vmatmul.mubr.f32.gmra.mrb[0].mxu0 %v310
      %v1424 = vpop.f32.mrb[0].mxu0
      %v1425 = vpop.f32.mrb[0].mxu0
      %1426 = vmatprep.mubr.f32.mxu0 0.0
      %1427 = vmatmul.mubr.f32.gmra.mrb[0].mxu0 %v313
      %v1428 = vpop.f32.mrb[0].mxu0
      %v1429 = vadd.f32 0.0, %v1428
      %v1430 = vpop.f32.mrb[0].mxu0
      %1431 = vmatprep.mubr.f32.mxu0 0.0
      %1432 = vmatmul.mubr.f32.gmra.mrb[0].mxu0 %v316
      %v1433 = vpop.f32.mrb[0].mxu0
      %v1434 = vadd.f32 0.0, %v1433
      %v1435 = vpop.f32.mrb[0].mxu0
      %1436 = vmatprep.mubr.f32.mxu0 0.0
      %1437 = vmatmul.mubr.f32.gmra.mrb[0].mxu0 %v319
      %v1438 = vpop.f32.mrb[0].mxu0
      %v1439 = vpop.f32.mrb[0].mxu0
      %1440 = vmatprep.mubr.f32.mxu0 0.0
      %1441 = vmatmul.mubr.f32.gmra.mrb[0].mxu0 %v322
      %v1442 = vpop.f32.mrb[0].mxu0
      %v1443 = vadd.f32 0.0, %v1442
      %v1444 = vpop.f32.mrb[0].mxu0
      %1445 = vmatprep.mubr.f32.mxu0 0.0
      %1446 = vmatmul.mubr.f32.gmra.mrb[0].mxu0 %v325
      %v1447 = vpop.f32.mrb[0].mxu0
      %v1448 = vadd.f32 0.0, %v1447
      %v1449 = vpop.f32.mrb[0].mxu0
      %1450 = vmatprep.mubr.f32.mxu0 0.0
      %1451 = vmatmul.mubr.f32.gmra.mrb[0].mxu0 %v328
      %v1452 = vpop.f32.mrb[0].mxu0
      %v1453 = vpop.f32.mrb[0].mxu0
      %1454 = vmatprep.mubr.f32.mxu0 0.0
      %1455 = vmatmul.mubr.f32.gmra.mrb[0].mxu0 %v331
      %v1456 = vpop.f32.mrb[0].mxu0
      %v1457 = vadd.f32 0.0, %v1456
      %v1458 = vpop.f32.mrb[0].mxu0
      %1459 = vmatprep.mubr.f32.mxu0 0.0
      %1460 = vmatmul.mubr.f32.gmra.mrb[0].mxu0 %v334
      %v1461 = vpop.f32.mrb[0].mxu0
      %v1462 = vadd.f32 0.0, %v1461
      %v1463 = vpop.f32.mrb[0].mxu0
      %1464 = vmatprep.mubr.f32.mxu0 0.0
      %1465 = vmatmul.mubr.f32.gmra.mrb[0].mxu0 %v1295
      %v1466 = vpop.f32.mrb[0].mxu0
      %v1467 = vpop.f32.mrb[0].mxu0
      %1468 = vmatprep.mubr.f32.mxu0 0.0
      %1469 = vmatmul.mubr.f32.gmra.mrb[0].mxu0 %v1298
      %v1470 = vpop.f32.mrb[0].mxu0
      %v1471 = vadd.f32 0.0, %v1470
      %v1472 = vpop.f32.mrb[0].mxu0
      %1473 = vmatprep.mubr.f32.mxu0 0.0
      %1474 = vmatmul.mubr.f32.gmra.mrb[0].mxu0 %v1301
      %v1475 = vpop.f32.mrb[0].mxu0
      %v1476 = vadd.f32 0.0, %v1475
      %v1477 = vpop.f32.mrb[0].mxu0
      %1478 = vmatprep.mubr.f32.mxu0 0.0
      %1479 = vmatmul.mubr.f32.gmra.mrb[0].mxu0 %v1304
      %v1480 = vpop.f32.mrb[0].mxu0
      %v1481 = vpop.f32.mrb[0].mxu0
      %1482 = vdwg.mxu0
      %v1483 = vadd.f32 %v1269, %v1373
      %v1484 = vadd.f32 %v1270, %v1378
      %v1485 = vadd.f32 %v1271, %v1387
      %v1486 = vadd.f32 %v1272, %v1392
      %v1487 = vadd.f32 %v1273, %v1401
      %v1488 = vadd.f32 %v1274, %v1406
      %v1489 = vadd.f32 %v1275, %v1415
      %v1490 = vadd.f32 %v1276, %v1420
      %v1491 = vadd.f32 %v1277, %v1429
      %v1492 = vadd.f32 %v1278, %v1434
      %v1493 = vadd.f32 %v1279, %v1443
      %v1494 = vadd.f32 %v1280, %v1448
      %v1495 = vadd.f32 %v1281, %v1457
      %v1496 = vadd.f32 %v1282, %v1462
      %v1497 = vadd.f32 %v1283, %v1471
      %v1498 = vadd.f32 %v1284, %v1476
      %v1499 = vrot.slane %v206, 2
      %v1500 = vrot.slane %v207, 2
      %v1501 = vrot.slane %v208, 2
      %v1502 = vsel %vm789, %v1500, %v1501
      %v1503 = vsel %vm789, %v1499, %v1500
      %v1504 = vsel %vm789, %v788, %v1499
      %v1505 = vsel %vm789, %v1501, %v768
      %s1506 = scalar_lea.vmem %s1, 40
      %v1507 = vld [vmem:[%s1506] sm:$0xff]
      %v1509 = vsel %vm266, %v1504, 0
      %v1512 = vsel %vm266, %v1503, 0
      %v1515 = vsel %vm266, %v1502, 0
      %v1518 = vsel %vm266, %v1505, 0
      %1520 = vmatprep.subr.mxu0 0.0
      %1521 = vmatpush1.msra.mxu0 %v1507
      %1522 = vmatprep.subr.mxu0 0.0
      %1523 = vmatpush1.msra.mxu0 0.0
      %1524 = vmatprep.subr.mxu0 0.0
      %1525 = vmatpush1.msra.mxu0 0.0
      %1526 = vmatprep.subr.mxu0 0.0
      %1527 = vmatpush1.msra.mxu0 0.0
      %1528 = vmatprep.subr.mxu0 0.0
      %1529 = vmatpush1.msra.mxu0 0.0
      %1530 = vmatprep.subr.mxu0 0.0
      %1531 = vmatpush1.msra.mxu0 0.0
      %1532 = vmatprep.subr.mxu0 0.0
      %1533 = vmatpush1.msra.mxu0 0.0
      %1534 = vmatprep.subr.mxu0 0.0
      %1535 = vmatpush1.msra.mxu0 0.0
      %1536 = vmatprep.subr.mxu0 0.0
      %1537 = vmatpush1.msra.mxu0 0.0
      %1538 = vmatprep.subr.mxu0 0.0
      %1539 = vmatpush1.msra.mxu0 0.0
      %1540 = vmatprep.subr.mxu0 0.0
      %1541 = vmatpush1.msra.mxu0 0.0
      %1542 = vmatprep.subr.mxu0 0.0
      %1543 = vmatpush1.msra.mxu0 0.0
      %1544 = vmatprep.subr.mxu0 0.0
      %1545 = vmatpush1.msra.mxu0 0.0
      %1546 = vmatprep.subr.mxu0 0.0
      %1547 = vmatpush1.msra.mxu0 0.0
      %1548 = vmatprep.subr.mxu0 0.0
      %1549 = vmatpush1.msra.mxu0 0.0
      %1550 = vmatprep.subr.mxu0 0.0
      %1551 = vmatpush1.msra.mxu0 0.0
      %1552 = vmatprep.subr.mxu0 0.0
      %1553 = vmatpush1.msra.mxu0 0.0
      %1554 = vmatprep.subr.mxu0 0.0
      %1555 = vmatpush1.msra.mxu0 0.0
      %1556 = vmatprep.subr.mxu0 0.0
      %1557 = vmatpush1.msra.mxu0 0.0
      %1558 = vmatprep.subr.mxu0 0.0
      %1559 = vmatpush1.msra.mxu0 0.0
      %1560 = vmatprep.subr.mxu0 0.0
      %1561 = vmatpush1.msra.mxu0 0.0
      %1562 = vmatprep.subr.mxu0 0.0
      %1563 = vmatpush1.msra.mxu0 0.0
      %1564 = vmatprep.subr.mxu0 0.0
      %1565 = vmatpush1.msra.mxu0 0.0
      %1566 = vmatprep.subr.mxu0 0.0
      %1567 = vmatpush1.msra.mxu0 0.0
      %1568 = vmatprep.subr.mxu0 0.0
      %1569 = vmatpush1.msra.mxu0 0.0
      %1570 = vmatprep.subr.mxu0 0.0
      %1571 = vmatpush1.msra.mxu0 0.0
      %1572 = vmatprep.subr.mxu0 0.0
      %1573 = vmatpush1.msra.mxu0 0.0
      %1574 = vmatprep.subr.mxu0 0.0
      %1575 = vmatpush1.msra.mxu0 0.0
      %1576 = vmatprep.subr.mxu0 0.0
      %1577 = vmatpush1.msra.mxu0 0.0
      %1578 = vmatprep.subr.mxu0 0.0
      %1579 = vmatpush1.msra.mxu0 0.0
      %1580 = vmatprep.subr.mxu0 0.0
      %1581 = vmatpush1.msra.mxu0 0.0
      %1582 = vmatprep.subr.mxu0 0.0
      %1583 = vmatpush1.msra.mxu0 0.0
      %1584 = vmatprep.mubr.f32.mxu0 0.0
      %1585 = vmatmul.mubr.f32.gmra.mrb[0].mxu0 %v826
      %v1586 = vpop.f32.mrb[0].mxu0
      %v1587 = vadd.f32 0.0, %v1586
      %v1588 = vpop.f32.mrb[0].mxu0
      %1589 = vmatprep.mubr.f32.mxu0 0.0
      %1590 = vmatmul.mubr.f32.gmra.mrb[0].mxu0 %v829
      %v1591 = vpop.f32.mrb[0].mxu0
      %v1592 = vadd.f32 0.0, %v1591
      %v1593 = vpop.f32.mrb[0].mxu0
      %1594 = vmatprep.mubr.f32.mxu0 0.0
      %1595 = vmatmul.mubr.f32.gmra.mrb[0].mxu0 %v832
      %v1596 = vpop.f32.mrb[0].mxu0
      %v1597 = vpop.f32.mrb[0].mxu0
      %1598 = vmatprep.mubr.f32.mxu0 0.0
      %1599 = vmatmul.mubr.f32.gmra.mrb[0].mxu0 %v835
      %v1600 = vpop.f32.mrb[0].mxu0
      %v1601 = vadd.f32 0.0, %v1600
      %v1602 = vpop.f32.mrb[0].mxu0
      %1603 = vmatprep.mubr.f32.mxu0 0.0
      %1604 = vmatmul.mubr.f32.gmra.mrb[0].mxu0 %v838
      %v1605 = vpop.f32.mrb[0].mxu0
      %v1606 = vadd.f32 0.0, %v1605
      %v1607 = vpop.f32.mrb[0].mxu0
      %1608 = vmatprep.mubr.f32.mxu0 0.0
      %1609 = vmatmul.mubr.f32.gmra.mrb[0].mxu0 %v841
      %v1610 = vpop.f32.mrb[0].mxu0
      %v1611 = vpop.f32.mrb[0].mxu0
      %1612 = vmatprep.mubr.f32.mxu0 0.0
      %1613 = vmatmul.mubr.f32.gmra.mrb[0].mxu0 %v844
      %v1614 = vpop.f32.mrb[0].mxu0
      %v1615 = vadd.f32 0.0, %v1614
      %v1616 = vpop.f32.mrb[0].mxu0
      %1617 = vmatprep.mubr.f32.mxu0 0.0
      %1618 = vmatmul.mubr.f32.gmra.mrb[0].mxu0 %v847
      %v1619 = vpop.f32.mrb[0].mxu0
      %v1620 = vadd.f32 0.0, %v1619
      %v1621 = vpop.f32.mrb[0].mxu0
      %1622 = vmatprep.mubr.f32.mxu0 0.0
      %1623 = vmatmul.mubr.f32.gmra.mrb[0].mxu0 %v850
      %v1624 = vpop.f32.mrb[0].mxu0
      %v1625 = vpop.f32.mrb[0].mxu0
      %1626 = vmatprep.mubr.f32.mxu0 0.0
      %1627 = vmatmul.mubr.f32.gmra.mrb[0].mxu0 %v853
      %v1628 = vpop.f32.mrb[0].mxu0
      %v1629 = vadd.f32 0.0, %v1628
      %v1630 = vpop.f32.mrb[0].mxu0
      %1631 = vmatprep.mubr.f32.mxu0 0.0
      %1632 = vmatmul.mubr.f32.gmra.mrb[0].mxu0 %v856
      %v1633 = vpop.f32.mrb[0].mxu0
      %v1634 = vadd.f32 0.0, %v1633
      %v1635 = vpop.f32.mrb[0].mxu0
      %1636 = vmatprep.mubr.f32.mxu0 0.0
      %1637 = vmatmul.mubr.f32.gmra.mrb[0].mxu0 %v859
      %v1638 = vpop.f32.mrb[0].mxu0
      %v1639 = vpop.f32.mrb[0].mxu0
      %1640 = vmatprep.mubr.f32.mxu0 0.0
      %1641 = vmatmul.mubr.f32.gmra.mrb[0].mxu0 %v862
      %v1642 = vpop.f32.mrb[0].mxu0
      %v1643 = vadd.f32 0.0, %v1642
      %v1644 = vpop.f32.mrb[0].mxu0
      %1645 = vmatprep.mubr.f32.mxu0 0.0
      %1646 = vmatmul.mubr.f32.gmra.mrb[0].mxu0 %v865
      %v1647 = vpop.f32.mrb[0].mxu0
      %v1648 = vadd.f32 0.0, %v1647
      %v1649 = vpop.f32.mrb[0].mxu0
      %1650 = vmatprep.mubr.f32.mxu0 0.0
      %1651 = vmatmul.mubr.f32.gmra.mrb[0].mxu0 %v868
      %v1652 = vpop.f32.mrb[0].mxu0
      %v1653 = vpop.f32.mrb[0].mxu0
      %1654 = vmatprep.mubr.f32.mxu0 0.0
      %1655 = vmatmul.mubr.f32.gmra.mrb[0].mxu0 %v871
      %v1656 = vpop.f32.mrb[0].mxu0
      %v1657 = vadd.f32 0.0, %v1656
      %v1658 = vpop.f32.mrb[0].mxu0
      %1659 = vmatprep.mubr.f32.mxu0 0.0
      %1660 = vmatmul.mubr.f32.gmra.mrb[0].mxu0 %v874
      %v1661 = vpop.f32.mrb[0].mxu0
      %v1662 = vadd.f32 0.0, %v1661
      %v1663 = vpop.f32.mrb[0].mxu0
      %1664 = vmatprep.mubr.f32.mxu0 0.0
      %1665 = vmatmul.mubr.f32.gmra.mrb[0].mxu0 %v877
      %v1666 = vpop.f32.mrb[0].mxu0
      %v1667 = vpop.f32.mrb[0].mxu0
      %1668 = vmatprep.mubr.f32.mxu0 0.0
      %1669 = vmatmul.mubr.f32.gmra.mrb[0].mxu0 %v880
      %v1670 = vpop.f32.mrb[0].mxu0
      %v1671 = vadd.f32 0.0, %v1670
      %v1672 = vpop.f32.mrb[0].mxu0
      %1673 = vmatprep.mubr.f32.mxu0 0.0
      %1674 = vmatmul.mubr.f32.gmra.mrb[0].mxu0 %v883
      %v1675 = vpop.f32.mrb[0].mxu0
      %v1676 = vadd.f32 0.0, %v1675
      %v1677 = vpop.f32.mrb[0].mxu0
      %1678 = vmatprep.mubr.f32.mxu0 0.0
      %1679 = vmatmul.mubr.f32.gmra.mrb[0].mxu0 %v1509
      %v1680 = vpop.f32.mrb[0].mxu0
      %v1681 = vpop.f32.mrb[0].mxu0
      %1682 = vmatprep.mubr.f32.mxu0 0.0
      %1683 = vmatmul.mubr.f32.gmra.mrb[0].mxu0 %v1512
      %v1684 = vpop.f32.mrb[0].mxu0
      %v1685 = vadd.f32 0.0, %v1684
      %v1686 = vpop.f32.mrb[0].mxu0
      %1687 = vmatprep.mubr.f32.mxu0 0.0
      %1688 = vmatmul.mubr.f32.gmra.mrb[0].mxu0 %v1515
      %v1689 = vpop.f32.mrb[0].mxu0
      %v1690 = vadd.f32 0.0, %v1689
      %v1691 = vpop.f32.mrb[0].mxu0
      %1692 = vmatprep.mubr.f32.mxu0 0.0
      %1693 = vmatmul.mubr.f32.gmra.mrb[0].mxu0 %v1518
      %v1694 = vpop.f32.mrb[0].mxu0
      %v1695 = vpop.f32.mrb[0].mxu0
      %1696 = vdwg.mxu0
      %v1697 = vadd.f32 %v1483, %v1587
      %v1698 = vadd.f32 %v1484, %v1592
      %v1699 = vadd.f32 %v1485, %v1601
      %v1700 = vadd.f32 %v1486, %v1606
      %v1701 = vadd.f32 %v1487, %v1615
      %v1702 = vadd.f32 %v1488, %v1620
      %v1703 = vadd.f32 %v1489, %v1629
      %v1704 = vadd.f32 %v1490, %v1634
      %v1705 = vadd.f32 %v1491, %v1643
      %v1706 = vadd.f32 %v1492, %v1648
      %v1707 = vadd.f32 %v1493, %v1657
      %v1708 = vadd.f32 %v1494, %v1662
      %v1709 = vadd.f32 %v1495, %v1671
      %v1710 = vadd.f32 %v1496, %v1676
      %v1711 = vadd.f32 %v1497, %v1685
      %v1712 = vadd.f32 %v1498, %v1690
      %s1713 = scalar_lea.vmem %s1, 48
      %v1714 = vld [vmem:[%s1713] sm:$0xff]
      %v1716 = vsel %vm266, %v209, 0
      %v1719 = vsel %vm266, %v210, 0
      %v1722 = vsel %vm266, %v211, 0
      %1724 = vmatprep.subr.mxu0 0.0
      %1725 = vmatpush1.msra.mxu0 %v1714
      %1726 = vmatprep.subr.mxu0 0.0
      %1727 = vmatpush1.msra.mxu0 0.0
      %1728 = vmatprep.subr.mxu0 0.0
      %1729 = vmatpush1.msra.mxu0 0.0
      %1730 = vmatprep.subr.mxu0 0.0
      %1731 = vmatpush1.msra.mxu0 0.0
      %1732 = vmatprep.subr.mxu0 0.0
      %1733 = vmatpush1.msra.mxu0 0.0
      %1734 = vmatprep.subr.mxu0 0.0
      %1735 = vmatpush1.msra.mxu0 0.0
      %1736 = vmatprep.subr.mxu0 0.0
      %1737 = vmatpush1.msra.mxu0 0.0
      %1738 = vmatprep.subr.mxu0 0.0
      %1739 = vmatpush1.msra.mxu0 0.0
      %1740 = vmatprep.subr.mxu0 0.0
      %1741 = vmatpush1.msra.mxu0 0.0
      %1742 = vmatprep.subr.mxu0 0.0
      %1743 = vmatpush1.msra.mxu0 0.0
      %1744 = vmatprep.subr.mxu0 0.0
      %1745 = vmatpush1.msra.mxu0 0.0
      %1746 = vmatprep.subr.mxu0 0.0
      %1747 = vmatpush1.msra.mxu0 0.0
      %1748 = vmatprep.subr.mxu0 0.0
      %1749 = vmatpush1.msra.mxu0 0.0
      %1750 = vmatprep.subr.mxu0 0.0
      %1751 = vmatpush1.msra.mxu0 0.0
      %1752 = vmatprep.subr.mxu0 0.0
      %1753 = vmatpush1.msra.mxu0 0.0
      %1754 = vmatprep.subr.mxu0 0.0
      %1755 = vmatpush1.msra.mxu0 0.0
      %1756 = vmatprep.subr.mxu0 0.0
      %1757 = vmatpush1.msra.mxu0 0.0
      %1758 = vmatprep.subr.mxu0 0.0
      %1759 = vmatpush1.msra.mxu0 0.0
      %1760 = vmatprep.subr.mxu0 0.0
      %1761 = vmatpush1.msra.mxu0 0.0
      %1762 = vmatprep.subr.mxu0 0.0
      %1763 = vmatpush1.msra.mxu0 0.0
      %1764 = vmatprep.subr.mxu0 0.0
      %1765 = vmatpush1.msra.mxu0 0.0
      %1766 = vmatprep.subr.mxu0 0.0
      %1767 = vmatpush1.msra.mxu0 0.0
      %1768 = vmatprep.subr.mxu0 0.0
      %1769 = vmatpush1.msra.mxu0 0.0
      %1770 = vmatprep.subr.mxu0 0.0
      %1771 = vmatpush1.msra.mxu0 0.0
      %1772 = vmatprep.subr.mxu0 0.0
      %1773 = vmatpush1.msra.mxu0 0.0
      %1774 = vmatprep.subr.mxu0 0.0
      %1775 = vmatpush1.msra.mxu0 0.0
      %1776 = vmatprep.subr.mxu0 0.0
      %1777 = vmatpush1.msra.mxu0 0.0
      %1778 = vmatprep.subr.mxu0 0.0
      %1779 = vmatpush1.msra.mxu0 0.0
      %1780 = vmatprep.subr.mxu0 0.0
      %1781 = vmatpush1.msra.mxu0 0.0
      %1782 = vmatprep.subr.mxu0 0.0
      %1783 = vmatpush1.msra.mxu0 0.0
      %1784 = vmatprep.subr.mxu0 0.0
      %1785 = vmatpush1.msra.mxu0 0.0
      %1786 = vmatprep.subr.mxu0 0.0
      %1787 = vmatpush1.msra.mxu0 0.0
      %1788 = vmatprep.mubr.f32.mxu0 0.0
      %1789 = vmatmul.mubr.f32.gmra.mrb[0].mxu0 %v535
      %v1790 = vpop.f32.mrb[0].mxu0
      %v1791 = vadd.f32 0.0, %v1790
      %v1792 = vpop.f32.mrb[0].mxu0
      %1793 = vmatprep.mubr.f32.mxu0 0.0
      %1794 = vmatmul.mubr.f32.gmra.mrb[0].mxu0 %v538
      %v1795 = vpop.f32.mrb[0].mxu0
      %v1796 = vadd.f32 0.0, %v1795
      %v1797 = vpop.f32.mrb[0].mxu0
      %1798 = vmatprep.mubr.f32.mxu0 0.0
      %1799 = vmatmul.mubr.f32.gmra.mrb[0].mxu0 %v541
      %v1800 = vpop.f32.mrb[0].mxu0
      %v1801 = vpop.f32.mrb[0].mxu0
      %1802 = vmatprep.mubr.f32.mxu0 0.0
      %1803 = vmatmul.mubr.f32.gmra.mrb[0].mxu0 %v544
      %v1804 = vpop.f32.mrb[0].mxu0
      %v1805 = vadd.f32 0.0, %v1804
      %v1806 = vpop.f32.mrb[0].mxu0
      %1807 = vmatprep.mubr.f32.mxu0 0.0
      %1808 = vmatmul.mubr.f32.gmra.mrb[0].mxu0 %v547
      %v1809 = vpop.f32.mrb[0].mxu0
      %v1810 = vadd.f32 0.0, %v1809
      %v1811 = vpop.f32.mrb[0].mxu0
      %1812 = vmatprep.mubr.f32.mxu0 0.0
      %1813 = vmatmul.mubr.f32.gmra.mrb[0].mxu0 %v550
      %v1814 = vpop.f32.mrb[0].mxu0
      %v1815 = vpop.f32.mrb[0].mxu0
      %1816 = vmatprep.mubr.f32.mxu0 0.0
      %1817 = vmatmul.mubr.f32.gmra.mrb[0].mxu0 %v553
      %v1818 = vpop.f32.mrb[0].mxu0
      %v1819 = vadd.f32 0.0, %v1818
      %v1820 = vpop.f32.mrb[0].mxu0
      %1821 = vmatprep.mubr.f32.mxu0 0.0
      %1822 = vmatmul.mubr.f32.gmra.mrb[0].mxu0 %v556
      %v1823 = vpop.f32.mrb[0].mxu0
      %v1824 = vadd.f32 0.0, %v1823
      %v1825 = vpop.f32.mrb[0].mxu0
      %1826 = vmatprep.mubr.f32.mxu0 0.0
      %1827 = vmatmul.mubr.f32.gmra.mrb[0].mxu0 %v559
      %v1828 = vpop.f32.mrb[0].mxu0
      %v1829 = vpop.f32.mrb[0].mxu0
      %1830 = vmatprep.mubr.f32.mxu0 0.0
      %1831 = vmatmul.mubr.f32.gmra.mrb[0].mxu0 %v562
      %v1832 = vpop.f32.mrb[0].mxu0
      %v1833 = vadd.f32 0.0, %v1832
      %v1834 = vpop.f32.mrb[0].mxu0
      %1835 = vmatprep.mubr.f32.mxu0 0.0
      %1836 = vmatmul.mubr.f32.gmra.mrb[0].mxu0 %v565
      %v1837 = vpop.f32.mrb[0].mxu0
      %v1838 = vadd.f32 0.0, %v1837
      %v1839 = vpop.f32.mrb[0].mxu0
      %1840 = vmatprep.mubr.f32.mxu0 0.0
      %1841 = vmatmul.mubr.f32.gmra.mrb[0].mxu0 %v568
      %v1842 = vpop.f32.mrb[0].mxu0
      %v1843 = vpop.f32.mrb[0].mxu0
      %1844 = vmatprep.mubr.f32.mxu0 0.0
      %1845 = vmatmul.mubr.f32.gmra.mrb[0].mxu0 %v571
      %v1846 = vpop.f32.mrb[0].mxu0
      %v1847 = vadd.f32 0.0, %v1846
      %v1848 = vpop.f32.mrb[0].mxu0
      %1849 = vmatprep.mubr.f32.mxu0 0.0
      %1850 = vmatmul.mubr.f32.gmra.mrb[0].mxu0 %v574
      %v1851 = vpop.f32.mrb[0].mxu0
      %v1852 = vadd.f32 0.0, %v1851
      %v1853 = vpop.f32.mrb[0].mxu0
      %1854 = vmatprep.mubr.f32.mxu0 0.0
      %1855 = vmatmul.mubr.f32.gmra.mrb[0].mxu0 %v577
      %v1856 = vpop.f32.mrb[0].mxu0
      %v1857 = vpop.f32.mrb[0].mxu0
      %1858 = vmatprep.mubr.f32.mxu0 0.0
      %1859 = vmatmul.mubr.f32.gmra.mrb[0].mxu0 %v580
      %v1860 = vpop.f32.mrb[0].mxu0
      %v1861 = vadd.f32 0.0, %v1860
      %v1862 = vpop.f32.mrb[0].mxu0
      %1863 = vmatprep.mubr.f32.mxu0 0.0
      %1864 = vmatmul.mubr.f32.gmra.mrb[0].mxu0 %v583
      %v1865 = vpop.f32.mrb[0].mxu0
      %v1866 = vadd.f32 0.0, %v1865
      %v1867 = vpop.f32.mrb[0].mxu0
      %1868 = vmatprep.mubr.f32.mxu0 0.0
      %1869 = vmatmul.mubr.f32.gmra.mrb[0].mxu0 %v586
      %v1870 = vpop.f32.mrb[0].mxu0
      %v1871 = vpop.f32.mrb[0].mxu0
      %1872 = vmatprep.mubr.f32.mxu0 0.0
      %1873 = vmatmul.mubr.f32.gmra.mrb[0].mxu0 %v1084
      %v1874 = vpop.f32.mrb[0].mxu0
      %v1875 = vadd.f32 0.0, %v1874
      %v1876 = vpop.f32.mrb[0].mxu0
      %1877 = vmatprep.mubr.f32.mxu0 0.0
      %1878 = vmatmul.mubr.f32.gmra.mrb[0].mxu0 %v1087
      %v1879 = vpop.f32.mrb[0].mxu0
      %v1880 = vadd.f32 0.0, %v1879
      %v1881 = vpop.f32.mrb[0].mxu0
      %1882 = vmatprep.mubr.f32.mxu0 0.0
      %1883 = vmatmul.mubr.f32.gmra.mrb[0].mxu0 %v1090
      %v1884 = vpop.f32.mrb[0].mxu0
      %v1885 = vpop.f32.mrb[0].mxu0
      %1886 = vmatprep.mubr.f32.mxu0 0.0
      %1887 = vmatmul.mubr.f32.gmra.mrb[0].mxu0 %v1716
      %v1888 = vpop.f32.mrb[0].mxu0
      %v1889 = vadd.f32 0.0, %v1888
      %v1890 = vpop.f32.mrb[0].mxu0
      %1891 = vmatprep.mubr.f32.mxu0 0.0
      %1892 = vmatmul.mubr.f32.gmra.mrb[0].mxu0 %v1719
      %v1893 = vpop.f32.mrb[0].mxu0
      %v1894 = vadd.f32 0.0, %v1893
      %v1895 = vpop.f32.mrb[0].mxu0
      %1896 = vmatprep.mubr.f32.mxu0 0.0
      %1897 = vmatmul.mubr.f32.gmra.mrb[0].mxu0 %v1722
      %v1898 = vpop.f32.mrb[0].mxu0
      %v1899 = vpop.f32.mrb[0].mxu0
      %1900 = vdwg.mxu0
      %v1901 = vadd.f32 %v1697, %v1791
      %v1902 = vadd.f32 %v1698, %v1796
      %v1903 = vadd.f32 %v1699, %v1805
      %v1904 = vadd.f32 %v1700, %v1810
      %v1905 = vadd.f32 %v1701, %v1819
      %v1906 = vadd.f32 %v1702, %v1824
      %v1907 = vadd.f32 %v1703, %v1833
      %v1908 = vadd.f32 %v1704, %v1838
      %v1909 = vadd.f32 %v1705, %v1847
      %v1910 = vadd.f32 %v1706, %v1852
      %v1911 = vadd.f32 %v1707, %v1861
      %v1912 = vadd.f32 %v1708, %v1866
      %v1913 = vadd.f32 %v1709, %v1875
      %v1914 = vadd.f32 %v1710, %v1880
      %v1915 = vadd.f32 %v1711, %v1889
      %v1916 = vadd.f32 %v1712, %v1894
      %v1917 = vrot.slane %v209, 1
      %v1918 = vrot.slane %v210, 1
      %v1919 = vrot.slane %v211, 1
      %v1920 = vsel %vm239, %v1918, %v1919
      %v1921 = vsel %vm239, %v1917, %v1918
      %v1922 = vsel %vm239, %v1287, %v1917
      %v1923 = vsel %vm239, %v1919, %v219
      %s1924 = scalar_lea.vmem %s1, 56
      %v1925 = vld [vmem:[%s1924] sm:$0xff]
      %v1927 = vsel %vm266, %v1922, 0
      %v1930 = vsel %vm266, %v1921, 0
      %v1933 = vsel %vm266, %v1920, 0
      %v1936 = vsel %vm266, %v1923, 0
      %1938 = vmatprep.subr.mxu0 0.0
      %1939 = vmatpush1.msra.mxu0 %v1925
      %1940 = vmatprep.subr.mxu0 0.0
      %1941 = vmatpush1.msra.mxu0 0.0
      %1942 = vmatprep.subr.mxu0 0.0
      %1943 = vmatpush1.msra.mxu0 0.0
      %1944 = vmatprep.subr.mxu0 0.0
      %1945 = vmatpush1.msra.mxu0 0.0
      %1946 = vmatprep.subr.mxu0 0.0
      %1947 = vmatpush1.msra.mxu0 0.0
      %1948 = vmatprep.subr.mxu0 0.0
      %1949 = vmatpush1.msra.mxu0 0.0
      %1950 = vmatprep.subr.mxu0 0.0
      %1951 = vmatpush1.msra.mxu0 0.0
      %1952 = vmatprep.subr.mxu0 0.0
      %1953 = vmatpush1.msra.mxu0 0.0
      %1954 = vmatprep.subr.mxu0 0.0
      %1955 = vmatpush1.msra.mxu0 0.0
      %1956 = vmatprep.subr.mxu0 0.0
      %1957 = vmatpush1.msra.mxu0 0.0
      %1958 = vmatprep.subr.mxu0 0.0
      %1959 = vmatpush1.msra.mxu0 0.0
      %1960 = vmatprep.subr.mxu0 0.0
      %1961 = vmatpush1.msra.mxu0 0.0
      %1962 = vmatprep.subr.mxu0 0.0
      %1963 = vmatpush1.msra.mxu0 0.0
      %1964 = vmatprep.subr.mxu0 0.0
      %1965 = vmatpush1.msra.mxu0 0.0
      %1966 = vmatprep.subr.mxu0 0.0
      %1967 = vmatpush1.msra.mxu0 0.0
      %1968 = vmatprep.subr.mxu0 0.0
      %1969 = vmatpush1.msra.mxu0 0.0
      %1970 = vmatprep.subr.mxu0 0.0
      %1971 = vmatpush1.msra.mxu0 0.0
      %1972 = vmatprep.subr.mxu0 0.0
      %1973 = vmatpush1.msra.mxu0 0.0
      %1974 = vmatprep.subr.mxu0 0.0
      %1975 = vmatpush1.msra.mxu0 0.0
      %1976 = vmatprep.subr.mxu0 0.0
      %1977 = vmatpush1.msra.mxu0 0.0
      %1978 = vmatprep.subr.mxu0 0.0
      %1979 = vmatpush1.msra.mxu0 0.0
      %1980 = vmatprep.subr.mxu0 0.0
      %1981 = vmatpush1.msra.mxu0 0.0
      %1982 = vmatprep.subr.mxu0 0.0
      %1983 = vmatpush1.msra.mxu0 0.0
      %1984 = vmatprep.subr.mxu0 0.0
      %1985 = vmatpush1.msra.mxu0 0.0
      %1986 = vmatprep.subr.mxu0 0.0
      %1987 = vmatpush1.msra.mxu0 0.0
      %1988 = vmatprep.subr.mxu0 0.0
      %1989 = vmatpush1.msra.mxu0 0.0
      %1990 = vmatprep.subr.mxu0 0.0
      %1991 = vmatpush1.msra.mxu0 0.0
      %1992 = vmatprep.subr.mxu0 0.0
      %1993 = vmatpush1.msra.mxu0 0.0
      %1994 = vmatprep.subr.mxu0 0.0
      %1995 = vmatpush1.msra.mxu0 0.0
      %1996 = vmatprep.subr.mxu0 0.0
      %1997 = vmatpush1.msra.mxu0 0.0
      %1998 = vmatprep.subr.mxu0 0.0
      %1999 = vmatpush1.msra.mxu0 0.0
      %2000 = vmatprep.subr.mxu0 0.0
      %2001 = vmatpush1.msra.mxu0 0.0
      %2002 = vmatprep.mubr.f32.mxu0 0.0
      %2003 = vmatmul.mubr.f32.gmra.mrb[0].mxu0 %v286
      %v2004 = vpop.f32.mrb[0].mxu0
      %v2005 = vadd.f32 0.0, %v2004
      %v2006 = vpop.f32.mrb[0].mxu0
      %2007 = vmatprep.mubr.f32.mxu0 0.0
      %2008 = vmatmul.mubr.f32.gmra.mrb[0].mxu0 %v289
      %v2009 = vpop.f32.mrb[0].mxu0
      %v2010 = vadd.f32 0.0, %v2009
      %v2011 = vpop.f32.mrb[0].mxu0
      %2012 = vmatprep.mubr.f32.mxu0 0.0
      %2013 = vmatmul.mubr.f32.gmra.mrb[0].mxu0 %v292
      %v2014 = vpop.f32.mrb[0].mxu0
      %v2015 = vpop.f32.mrb[0].mxu0
      %2016 = vmatprep.mubr.f32.mxu0 0.0
      %2017 = vmatmul.mubr.f32.gmra.mrb[0].mxu0 %v295
      %v2018 = vpop.f32.mrb[0].mxu0
      %v2019 = vadd.f32 0.0, %v2018
      %v2020 = vpop.f32.mrb[0].mxu0
      %2021 = vmatprep.mubr.f32.mxu0 0.0
      %2022 = vmatmul.mubr.f32.gmra.mrb[0].mxu0 %v298
      %v2023 = vpop.f32.mrb[0].mxu0
      %v2024 = vadd.f32 0.0, %v2023
      %v2025 = vpop.f32.mrb[0].mxu0
      %2026 = vmatprep.mubr.f32.mxu0 0.0
      %2027 = vmatmul.mubr.f32.gmra.mrb[0].mxu0 %v301
      %v2028 = vpop.f32.mrb[0].mxu0
      %v2029 = vpop.f32.mrb[0].mxu0
      %2030 = vmatprep.mubr.f32.mxu0 0.0
      %2031 = vmatmul.mubr.f32.gmra.mrb[0].mxu0 %v304
      %v2032 = vpop.f32.mrb[0].mxu0
      %v2033 = vadd.f32 0.0, %v2032
      %v2034 = vpop.f32.mrb[0].mxu0
      %2035 = vmatprep.mubr.f32.mxu0 0.0
      %2036 = vmatmul.mubr.f32.gmra.mrb[0].mxu0 %v307
      %v2037 = vpop.f32.mrb[0].mxu0
      %v2038 = vadd.f32 0.0, %v2037
      %v2039 = vpop.f32.mrb[0].mxu0
      %2040 = vmatprep.mubr.f32.mxu0 0.0
      %2041 = vmatmul.mubr.f32.gmra.mrb[0].mxu0 %v310
      %v2042 = vpop.f32.mrb[0].mxu0
      %v2043 = vpop.f32.mrb[0].mxu0
      %2044 = vmatprep.mubr.f32.mxu0 0.0
      %2045 = vmatmul.mubr.f32.gmra.mrb[0].mxu0 %v313
      %v2046 = vpop.f32.mrb[0].mxu0
      %v2047 = vadd.f32 0.0, %v2046
      %v2048 = vpop.f32.mrb[0].mxu0
      %2049 = vmatprep.mubr.f32.mxu0 0.0
      %2050 = vmatmul.mubr.f32.gmra.mrb[0].mxu0 %v316
      %v2051 = vpop.f32.mrb[0].mxu0
      %v2052 = vadd.f32 0.0, %v2051
      %v2053 = vpop.f32.mrb[0].mxu0
      %2054 = vmatprep.mubr.f32.mxu0 0.0
      %2055 = vmatmul.mubr.f32.gmra.mrb[0].mxu0 %v319
      %v2056 = vpop.f32.mrb[0].mxu0
      %v2057 = vpop.f32.mrb[0].mxu0
      %2058 = vmatprep.mubr.f32.mxu0 0.0
      %2059 = vmatmul.mubr.f32.gmra.mrb[0].mxu0 %v322
      %v2060 = vpop.f32.mrb[0].mxu0
      %v2061 = vadd.f32 0.0, %v2060
      %v2062 = vpop.f32.mrb[0].mxu0
      %2063 = vmatprep.mubr.f32.mxu0 0.0
      %2064 = vmatmul.mubr.f32.gmra.mrb[0].mxu0 %v325
      %v2065 = vpop.f32.mrb[0].mxu0
      %v2066 = vadd.f32 0.0, %v2065
      %v2067 = vpop.f32.mrb[0].mxu0
      %2068 = vmatprep.mubr.f32.mxu0 0.0
      %2069 = vmatmul.mubr.f32.gmra.mrb[0].mxu0 %v328
      %v2070 = vpop.f32.mrb[0].mxu0
      %v2071 = vpop.f32.mrb[0].mxu0
      %2072 = vmatprep.mubr.f32.mxu0 0.0
      %2073 = vmatmul.mubr.f32.gmra.mrb[0].mxu0 %v331
      %v2074 = vpop.f32.mrb[0].mxu0
      %v2075 = vadd.f32 0.0, %v2074
      %v2076 = vpop.f32.mrb[0].mxu0
      %2077 = vmatprep.mubr.f32.mxu0 0.0
      %2078 = vmatmul.mubr.f32.gmra.mrb[0].mxu0 %v334
      %v2079 = vpop.f32.mrb[0].mxu0
      %v2080 = vadd.f32 0.0, %v2079
      %v2081 = vpop.f32.mrb[0].mxu0
      %2082 = vmatprep.mubr.f32.mxu0 0.0
      %2083 = vmatmul.mubr.f32.gmra.mrb[0].mxu0 %v1295
      %v2084 = vpop.f32.mrb[0].mxu0
      %v2085 = vpop.f32.mrb[0].mxu0
      %2086 = vmatprep.mubr.f32.mxu0 0.0
      %2087 = vmatmul.mubr.f32.gmra.mrb[0].mxu0 %v1298
      %v2088 = vpop.f32.mrb[0].mxu0
      %v2089 = vadd.f32 0.0, %v2088
      %v2090 = vpop.f32.mrb[0].mxu0
      %2091 = vmatprep.mubr.f32.mxu0 0.0
      %2092 = vmatmul.mubr.f32.gmra.mrb[0].mxu0 %v1301
      %v2093 = vpop.f32.mrb[0].mxu0
      %v2094 = vadd.f32 0.0, %v2093
      %v2095 = vpop.f32.mrb[0].mxu0
      %2096 = vmatprep.mubr.f32.mxu0 0.0
      %2097 = vmatmul.mubr.f32.gmra.mrb[0].mxu0 %v1927
      %v2098 = vpop.f32.mrb[0].mxu0
      %v2099 = vpop.f32.mrb[0].mxu0
      %2100 = vmatprep.mubr.f32.mxu0 0.0
      %2101 = vmatmul.mubr.f32.gmra.mrb[0].mxu0 %v1930
      %v2102 = vpop.f32.mrb[0].mxu0
      %v2103 = vadd.f32 0.0, %v2102
      %v2104 = vpop.f32.mrb[0].mxu0
      %2105 = vmatprep.mubr.f32.mxu0 0.0
      %2106 = vmatmul.mubr.f32.gmra.mrb[0].mxu0 %v1933
      %v2107 = vpop.f32.mrb[0].mxu0
      %v2108 = vadd.f32 0.0, %v2107
      %v2109 = vpop.f32.mrb[0].mxu0
      %2110 = vmatprep.mubr.f32.mxu0 0.0
      %2111 = vmatmul.mubr.f32.gmra.mrb[0].mxu0 %v1936
      %v2112 = vpop.f32.mrb[0].mxu0
      %v2113 = vpop.f32.mrb[0].mxu0
      %2114 = vdwg.mxu0
      %v2115 = vadd.f32 %v1901, %v2005
      %v2116 = vadd.f32 %v1902, %v2010
      %v2117 = vadd.f32 %v1903, %v2019
      %v2118 = vadd.f32 %v1904, %v2024
      %v2119 = vadd.f32 %v1905, %v2033
      %v2120 = vadd.f32 %v1906, %v2038
      %v2121 = vadd.f32 %v1907, %v2047
      %v2122 = vadd.f32 %v1908, %v2052
      %v2123 = vadd.f32 %v1909, %v2061
      %v2124 = vadd.f32 %v1910, %v2066
      %v2125 = vadd.f32 %v1911, %v2075
      %v2126 = vadd.f32 %v1912, %v2080
      %v2127 = vadd.f32 %v1913, %v2089
      %v2128 = vadd.f32 %v1914, %v2094
      %v2129 = vadd.f32 %v1915, %v2103
      %v2130 = vadd.f32 %v1916, %v2108
      %v2131 = vrot.slane %v209, 2
      %v2132 = vrot.slane %v210, 2
      %v2133 = vrot.slane %v211, 2
      %v2134 = vsel %vm789, %v2132, %v2133
      %v2135 = vsel %vm789, %v2131, %v2132
      %v2136 = vsel %vm789, %v1501, %v2131
      %v2137 = vsel %vm789, %v2133, %v771
      %s2138 = scalar_lea.vmem %s1, 64
      %v2139 = vld [vmem:[%s2138] sm:$0xff]
      %v2141 = vsel %vm266, %v2136, 0
      %v2144 = vsel %vm266, %v2135, 0
      %v2147 = vsel %vm266, %v2134, 0
      %v2150 = vsel %vm266, %v2137, 0
      %2152 = vmatprep.subr.mxu0 0.0
      %2153 = vmatpush1.msra.mxu0 %v2139
      %2154 = vmatprep.subr.mxu0 0.0
      %2155 = vmatpush1.msra.mxu0 0.0
      %2156 = vmatprep.subr.mxu0 0.0
      %2157 = vmatpush1.msra.mxu0 0.0
      %2158 = vmatprep.subr.mxu0 0.0
      %2159 = vmatpush1.msra.mxu0 0.0
      %2160 = vmatprep.subr.mxu0 0.0
      %2161 = vmatpush1.msra.mxu0 0.0
      %2162 = vmatprep.subr.mxu0 0.0
      %2163 = vmatpush1.msra.mxu0 0.0
      %2164 = vmatprep.subr.mxu0 0.0
      %2165 = vmatpush1.msra.mxu0 0.0
      %2166 = vmatprep.subr.mxu0 0.0
      %2167 = vmatpush1.msra.mxu0 0.0
      %2168 = vmatprep.subr.mxu0 0.0
      %2169 = vmatpush1.msra.mxu0 0.0
      %2170 = vmatprep.subr.mxu0 0.0
      %2171 = vmatpush1.msra.mxu0 0.0
      %2172 = vmatprep.subr.mxu0 0.0
      %2173 = vmatpush1.msra.mxu0 0.0
      %2174 = vmatprep.subr.mxu0 0.0
      %2175 = vmatpush1.msra.mxu0 0.0
      %2176 = vmatprep.subr.mxu0 0.0
      %2177 = vmatpush1.msra.mxu0 0.0
      %2178 = vmatprep.subr.mxu0 0.0
      %2179 = vmatpush1.msra.mxu0 0.0
      %2180 = vmatprep.subr.mxu0 0.0
      %2181 = vmatpush1.msra.mxu0 0.0
      %2182 = vmatprep.subr.mxu0 0.0
      %2183 = vmatpush1.msra.mxu0 0.0
      %2184 = vmatprep.subr.mxu0 0.0
      %2185 = vmatpush1.msra.mxu0 0.0
      %2186 = vmatprep.subr.mxu0 0.0
      %2187 = vmatpush1.msra.mxu0 0.0
      %2188 = vmatprep.subr.mxu0 0.0
      %2189 = vmatpush1.msra.mxu0 0.0
      %2190 = vmatprep.subr.mxu0 0.0
      %2191 = vmatpush1.msra.mxu0 0.0
      %2192 = vmatprep.subr.mxu0 0.0
      %2193 = vmatpush1.msra.mxu0 0.0
      %2194 = vmatprep.subr.mxu0 0.0
      %2195 = vmatpush1.msra.mxu0 0.0
      %2196 = vmatprep.subr.mxu0 0.0
      %2197 = vmatpush1.msra.mxu0 0.0
      %2198 = vmatprep.subr.mxu0 0.0
      %2199 = vmatpush1.msra.mxu0 0.0
      %2200 = vmatprep.subr.mxu0 0.0
      %2201 = vmatpush1.msra.mxu0 0.0
      %2202 = vmatprep.subr.mxu0 0.0
      %2203 = vmatpush1.msra.mxu0 0.0
      %2204 = vmatprep.subr.mxu0 0.0
      %2205 = vmatpush1.msra.mxu0 0.0
      %2206 = vmatprep.subr.mxu0 0.0
      %2207 = vmatpush1.msra.mxu0 0.0
      %2208 = vmatprep.subr.mxu0 0.0
      %2209 = vmatpush1.msra.mxu0 0.0
      %2210 = vmatprep.subr.mxu0 0.0
      %2211 = vmatpush1.msra.mxu0 0.0
      %2212 = vmatprep.subr.mxu0 0.0
      %2213 = vmatpush1.msra.mxu0 0.0
      %2214 = vmatprep.subr.mxu0 0.0
      %2215 = vmatpush1.msra.mxu0 0.0
      %2216 = vmatprep.mubr.f32.mxu0 0.0
      %2217 = vmatmul.mubr.f32.gmra.mrb[0].mxu0 %v835
      %v2218 = vpop.f32.mrb[0].mxu0
      %v2219 = vadd.f32 0.0, %v2218
      %v2220 = vpop.f32.mrb[0].mxu0
      %2221 = vmatprep.mubr.f32.mxu0 0.0
      %2222 = vmatmul.mubr.f32.gmra.mrb[0].mxu0 %v838
      %v2223 = vpop.f32.mrb[0].mxu0
      %v2224 = vadd.f32 0.0, %v2223
      %v2225 = vpop.f32.mrb[0].mxu0
      %2226 = vmatprep.mubr.f32.mxu0 0.0
      %2227 = vmatmul.mubr.f32.gmra.mrb[0].mxu0 %v841
      %v2228 = vpop.f32.mrb[0].mxu0
      %v2229 = vpop.f32.mrb[0].mxu0
      %2230 = vmatprep.mubr.f32.mxu0 0.0
      %2231 = vmatmul.mubr.f32.gmra.mrb[0].mxu0 %v844
      %v2232 = vpop.f32.mrb[0].mxu0
      %v2233 = vadd.f32 0.0, %v2232
      %v2234 = vpop.f32.mrb[0].mxu0
      %2235 = vmatprep.mubr.f32.mxu0 0.0
      %2236 = vmatmul.mubr.f32.gmra.mrb[0].mxu0 %v847
      %v2237 = vpop.f32.mrb[0].mxu0
      %v2238 = vadd.f32 0.0, %v2237
      %v2239 = vpop.f32.mrb[0].mxu0
      %2240 = vmatprep.mubr.f32.mxu0 0.0
      %2241 = vmatmul.mubr.f32.gmra.mrb[0].mxu0 %v850
      %v2242 = vpop.f32.mrb[0].mxu0
      %v2243 = vpop.f32.mrb[0].mxu0
      %2244 = vmatprep.mubr.f32.mxu0 0.0
      %2245 = vmatmul.mubr.f32.gmra.mrb[0].mxu0 %v853
      %v2246 = vpop.f32.mrb[0].mxu0
      %v2247 = vadd.f32 0.0, %v2246
      %v2248 = vpop.f32.mrb[0].mxu0
      %2249 = vmatprep.mubr.f32.mxu0 0.0
      %2250 = vmatmul.mubr.f32.gmra.mrb[0].mxu0 %v856
      %v2251 = vpop.f32.mrb[0].mxu0
      %v2252 = vadd.f32 0.0, %v2251
      %v2253 = vpop.f32.mrb[0].mxu0
      %2254 = vmatprep.mubr.f32.mxu0 0.0
      %2255 = vmatmul.mubr.f32.gmra.mrb[0].mxu0 %v859
      %v2256 = vpop.f32.mrb[0].mxu0
      %v2257 = vpop.f32.mrb[0].mxu0
      %2258 = vmatprep.mubr.f32.mxu0 0.0
      %2259 = vmatmul.mubr.f32.gmra.mrb[0].mxu0 %v862
      %v2260 = vpop.f32.mrb[0].mxu0
      %v2261 = vadd.f32 0.0, %v2260
      %v2262 = vpop.f32.mrb[0].mxu0
      %2263 = vmatprep.mubr.f32.mxu0 0.0
      %2264 = vmatmul.mubr.f32.gmra.mrb[0].mxu0 %v865
      %v2265 = vpop.f32.mrb[0].mxu0
      %v2266 = vadd.f32 0.0, %v2265
      %v2267 = vpop.f32.mrb[0].mxu0
      %2268 = vmatprep.mubr.f32.mxu0 0.0
      %2269 = vmatmul.mubr.f32.gmra.mrb[0].mxu0 %v868
      %v2270 = vpop.f32.mrb[0].mxu0
      %v2271 = vpop.f32.mrb[0].mxu0
      %2272 = vmatprep.mubr.f32.mxu0 0.0
      %2273 = vmatmul.mubr.f32.gmra.mrb[0].mxu0 %v871
      %v2274 = vpop.f32.mrb[0].mxu0
      %v2275 = vadd.f32 0.0, %v2274
      %v2276 = vpop.f32.mrb[0].mxu0
      %2277 = vmatprep.mubr.f32.mxu0 0.0
      %2278 = vmatmul.mubr.f32.gmra.mrb[0].mxu0 %v874
      %v2279 = vpop.f32.mrb[0].mxu0
      %v2280 = vadd.f32 0.0, %v2279
      %v2281 = vpop.f32.mrb[0].mxu0
      %2282 = vmatprep.mubr.f32.mxu0 0.0
      %2283 = vmatmul.mubr.f32.gmra.mrb[0].mxu0 %v877
      %v2284 = vpop.f32.mrb[0].mxu0
      %v2285 = vpop.f32.mrb[0].mxu0
      %2286 = vmatprep.mubr.f32.mxu0 0.0
      %2287 = vmatmul.mubr.f32.gmra.mrb[0].mxu0 %v880
      %v2288 = vpop.f32.mrb[0].mxu0
      %v2289 = vadd.f32 0.0, %v2288
      %v2290 = vpop.f32.mrb[0].mxu0
      %2291 = vmatprep.mubr.f32.mxu0 0.0
      %2292 = vmatmul.mubr.f32.gmra.mrb[0].mxu0 %v883
      %v2293 = vpop.f32.mrb[0].mxu0
      %v2294 = vadd.f32 0.0, %v2293
      %v2295 = vpop.f32.mrb[0].mxu0
      %2296 = vmatprep.mubr.f32.mxu0 0.0
      %2297 = vmatmul.mubr.f32.gmra.mrb[0].mxu0 %v1509
      %v2298 = vpop.f32.mrb[0].mxu0
      %v2299 = vpop.f32.mrb[0].mxu0
      %2300 = vmatprep.mubr.f32.mxu0 0.0
      %2301 = vmatmul.mubr.f32.gmra.mrb[0].mxu0 %v1512
      %v2302 = vpop.f32.mrb[0].mxu0
      %v2303 = vadd.f32 0.0, %v2302
      %v2304 = vpop.f32.mrb[0].mxu0
      %2305 = vmatprep.mubr.f32.mxu0 0.0
      %2306 = vmatmul.mubr.f32.gmra.mrb[0].mxu0 %v1515
      %v2307 = vpop.f32.mrb[0].mxu0
      %v2308 = vadd.f32 0.0, %v2307
      %v2309 = vpop.f32.mrb[0].mxu0
      %2310 = vmatprep.mubr.f32.mxu0 0.0
      %2311 = vmatmul.mubr.f32.gmra.mrb[0].mxu0 %v2141
      %v2312 = vpop.f32.mrb[0].mxu0
      %v2313 = vpop.f32.mrb[0].mxu0
      %2314 = vmatprep.mubr.f32.mxu0 0.0
      %2315 = vmatmul.mubr.f32.gmra.mrb[0].mxu0 %v2144
      %v2316 = vpop.f32.mrb[0].mxu0
      %v2317 = vadd.f32 0.0, %v2316
      %v2318 = vpop.f32.mrb[0].mxu0
      %2319 = vmatprep.mubr.f32.mxu0 0.0
      %2320 = vmatmul.mubr.f32.gmra.mrb[0].mxu0 %v2147
      %v2321 = vpop.f32.mrb[0].mxu0
      %v2322 = vadd.f32 0.0, %v2321
      %v2323 = vpop.f32.mrb[0].mxu0
      %2324 = vmatprep.mubr.f32.mxu0 0.0
      %2325 = vmatmul.mubr.f32.gmra.mrb[0].mxu0 %v2150
      %v2326 = vpop.f32.mrb[0].mxu0
      %v2327 = vpop.f32.mrb[0].mxu0
      %2328 = vdwg.mxu0
      %v2329 = vadd.f32 %v2115, %v2219
      %v2330 = vadd.f32 %v2116, %v2224
      %v2331 = vadd.f32 %v2117, %v2233
      %v2332 = vadd.f32 %v2118, %v2238
      %v2333 = vadd.f32 %v2119, %v2247
      %v2334 = vadd.f32 %v2120, %v2252
      %v2335 = vadd.f32 %v2121, %v2261
      %v2336 = vadd.f32 %v2122, %v2266
      %v2337 = vadd.f32 %v2123, %v2275
      %v2338 = vadd.f32 %v2124, %v2280
      %v2339 = vadd.f32 %v2125, %v2289
      %v2340 = vadd.f32 %v2126, %v2294
      %v2341 = vadd.f32 %v2127, %v2303
      %v2342 = vadd.f32 %v2128, %v2308
      %v2343 = vadd.f32 %v2129, %v2317
      %v2344 = vadd.f32 %v2130, %v2322
      %v2345 = vmax.f32 %v2329, 0.0
      %v2346 = vmax.f32 %v2330, 0.0
      %v2347 = vmax.f32 %v2331, 0.0
      %v2348 = vmax.f32 %v2332, 0.0
      %v2349 = vmax.f32 %v2333, 0.0
      %v2350 = vmax.f32 %v2334, 0.0
      %v2351 = vmax.f32 %v2335, 0.0
      %v2352 = vmax.f32 %v2336, 0.0
      %v2353 = vmax.f32 %v2337, 0.0
      %v2354 = vmax.f32 %v2338, 0.0
      %v2355 = vmax.f32 %v2339, 0.0
      %v2356 = vmax.f32 %v2340, 0.0
      %v2357 = vmax.f32 %v2341, 0.0
      %v2358 = vmax.f32 %v2342, 0.0
      %v2359 = vmax.f32 %v2343, 0.0
      %v2360 = vmax.f32 %v2344, 0.0
      %s2361 = smul.u32 0, 16
      %s2362 = scalar_lea.vmem %s179, %s2361
      %2363 = vst.msk [vmem:[%s2362] sm:$0xff] %vm266, %v2345
      %2364 = vst.msk [vmem:[%s2362 + $0x8] sm:$0xff] %vm266, %v2346
      %2365 = vst.msk [vmem:[%s2362 + $0x10] sm:$0xff] %vm266, %v2347
      %2366 = vst.msk [vmem:[%s2362 + $0x18] sm:$0xff] %vm266, %v2348
      %2367 = vst.msk [vmem:[%s2362 + $0x20] sm:$0xff] %vm266, %v2349
      %2368 = vst.msk [vmem:[%s2362 + $0x28] sm:$0xff] %vm266, %v2350
      %2369 = vst.msk [vmem:[%s2362 + $0x30] sm:$0xff] %vm266, %v2351
      %2370 = vst.msk [vmem:[%s2362 + $0x38] sm:$0xff] %vm266, %v2352
      %2371 = vst.msk [vmem:[%s2362 + $0x40] sm:$0xff] %vm266, %v2353
      %2372 = vst.msk [vmem:[%s2362 + $0x48] sm:$0xff] %vm266, %v2354
      %2373 = vst.msk [vmem:[%s2362 + $0x50] sm:$0xff] %vm266, %v2355
      %2374 = vst.msk [vmem:[%s2362 + $0x58] sm:$0xff] %vm266, %v2356
      %2375 = vst.msk [vmem:[%s2362 + $0x60] sm:$0xff] %vm266, %v2357
      %2376 = vst.msk [vmem:[%s2362 + $0x68] sm:$0xff] %vm266, %v2358
      %2377 = vst.msk [vmem:[%s2362 + $0x70] sm:$0xff] %vm266, %v2359
      %2378 = vst.msk [vmem:[%s2362 + $0x78] sm:$0xff] %vm266, %v2360
      %p2379 = scmp.lt.s32.totalorder %s17, 1
      %s2380 = scalar_select %p2379, %s17, 1
      %p2381 = scmp.lt.s32.totalorder %s18, 1
      %s2382 = scalar_select %p2381, %s18, 1
      %s2383 = smul.addr %s2382, 16
      %s2384 = smul.addr %s2380, 32
      %s2385 = sadd.s32 %s2383, %s2384
      %s2386 = smul.addr %s2385, 8
      %s2387 = scalar_lea.vmem %s2, %s2386
      // Predicated region
      $region29: #{tpu_custom_call.1} parent=27 // pred_check
        %p2388 = pneg %p94
      $region30: #{tpu_custom_call.1} parent=27 // pred_check_branch
        %2390 = sbr.rel (%p2388) target = $region32
      $region31: #{tpu_custom_call.1} parent=27 // pred_region
        _
      $region32: #{tpu_custom_call.1} parent=27 // pred_fallthru
        _
    $region28: #{tpu_custom_call.1} parent=5 // pred_fallthru
      _
    %p2391 = scmp.le.s32.totalorder 2, %s8
    // Predicated region
    $region33: #{tpu_custom_call.1} parent=5 // pred_check
      %p2392 = pneg %p2391
    $region34: #{tpu_custom_call.1} parent=5 // pred_check_branch
      %2394 = sbr.rel (%p2392) target = $region36
    $region35: #{tpu_custom_call.1} parent=5 // pred_region
      %s2395 = ssub.s32 %s8, 2
      // Predicated region
      $region37: #{tpu_custom_call.1} parent=35 // pred_check
        %p2396 = pneg %p100
      $region38: #{tpu_custom_call.1} parent=35 // pred_check_branch
        %2398 = sbr.rel (%p2396) target = $region40
      $region39: #{tpu_custom_call.1} parent=35 // pred_region
        %p2399 = scmp.lt.s32.totalorder %s19, 1
        %s2400 = scalar_select %p2399, %s19, 1
        %p2401 = scmp.lt.s32.totalorder %s20, 1
        %s2402 = scalar_select %p2401, %s20, 1
        %s2403 = smul.addr %s2402, 16
        %s2404 = smul.addr %s2400, 32
        %s2405 = sadd.s32 %s2403, %s2404
        %s2406 = smul.addr %s2405, 8
        %s2407 = scalar_lea.vmem %s2, %s2406
      $region40: #{tpu_custom_call.1} parent=35 // pred_fallthru
        _
    $region36: #{tpu_custom_call.1} parent=5 // pred_fallthru
      _
  $region6: #{tpu_custom_call.1} parent=0 // loop_footer
    %s12 = sadd.s32 1, %s8
  $region7: #{tpu_custom_call.1} parent=0 // loop_footer_branch
    %7 = sbr.rel target = $region3
  $region8: #{tpu_custom_call.1} parent=0 // loop_exit
    _

</llo_original>
